<compile_context>
chip_gen: v7x
topology: tpu7x:2x2x1
jax: 0.10.0
libtpu: 0.0.40
codegen_flags: <defaults>
</compile_context>

<pallas_src>
import functools

import jax
import jax.numpy as jnp
from jax import lax
from jax.experimental import pallas as pl
from jax.experimental.pallas import tpu as pltpu

EPS = 1e-5


def _round_up(a, b):
    return (a + b - 1) // b * b


# ----------------------------------------------------------------------------
# Fused kernel: one grid step = one (batch element, D-tile).
# Layout: channels on sublanes, flattened zero-padded spatial volume on lanes.
# ----------------------------------------------------------------------------
def _basic_block_kernel(mask_ref, x_ref, w1_ref, b1_ref, w2_ref, b2_ref,
                        o_ref, hslab_ref, *,
                        S_h, S_d, L_h, L_o, HOFF, ROFF, HP, compute_dtype):
    """
      mask_ref : (1, L_h)             1.0 where an h1 lane is a real voxel inside
                                      the global D range, else 0.0 (per tile)
      x_ref    : (Cin, (TD+4)*S_d)    pre-padded input window (compute dtype)
      w*_ref   : (3, C_out, 9*C_in)   per-kd weights, BN scale folded, compute dtype
      b*_ref   : (C_out, 1)           BN shift, f32
      o_ref    : (Cout, TD*S_d)       output tile in padded-slab coords (wrapper crops)
      hslab_ref: (Cmid, HP)  VMEM     intermediate activation, padded slab, compute dtype
    """

    def conv(read_slab, w_ref, L):
        # 3 MXU matmuls, K = 9*Cin each: (kh, kw) taps folded into the
        # contraction dim; only 2 VPU partial adds (kd) remain.
        acc = None
        for kd in range(3):
            base = kd * S_d
            rhs = jnp.concatenate(
                [read_slab(base + kh * S_h + kw, L)
                 for kh in range(3) for kw in range(3)], axis=0)       # (9*Cin, L)
            part = jnp.dot(w_ref[kd], rhs, preferred_element_type=jnp.float32)
            acc = part if acc is None else acc + part
        return acc                                                     # (Cout, L) f32

    # ---- conv1 + bn1 + relu over TD+2 h-planes (includes conv2's D-halo) ----
    h = conv(lambda off, L: x_ref[:, off:off + L], w1_ref, L_h)
    h = jnp.maximum(h + b1_ref[...], 0.0) * mask_ref[...]   # zero junk rows / out-of-range planes

    # Store the intermediate into its padded slab.  Only the tiny head/tail halo
    # lanes are outside the masked interior store -> zero just those every step
    # (no cross-grid-step persistence assumption; safe under megacore splits).
    cmid = hslab_ref.shape[0]
    hslab_ref[:, 0:HOFF] = jnp.zeros((cmid, HOFF), hslab_ref.dtype)
    hslab_ref[:, HOFF + L_h:HP] = jnp.zeros((cmid, HP - HOFF - L_h), hslab_ref.dtype)
    hslab_ref[:, HOFF:HOFF + L_h] = h.astype(compute_dtype)

    # ---- conv2 + bn2 + residual + relu ---------------------------------------
    y = conv(lambda off, L: hslab_ref[:, off:off + L], w2_ref, L_o)
    resid = x_ref[:, ROFF:ROFF + L_o].astype(jnp.float32)   # residual: contiguous slice of the window
    o_ref[...] = jnp.maximum(y + b2_ref[...] + resid, 0.0).astype(o_ref.dtype)


# ----------------------------------------------------------------------------
# Host-side folding helpers, footprint estimate, wrapper
# ----------------------------------------------------------------------------
def _fold_bn(gamma, beta, mean, var):
    scale = gamma / jnp.sqrt(var + EPS)
    shift = beta - mean * scale
    return scale, shift


def _fold_conv_weight(w, scale, compute_dtype):
    """(Cout, Cin, 3, 3, 3) torch layout -> (3, Cout, 9*Cin); contraction = (kh, kw, ci)."""
    cout, cin = w.shape[0], w.shape[1]
    wt = jnp.transpose(w, (2, 0, 3, 4, 1))                 # (kd, co, kh, kw, ci)
    wt = wt * scale[None, :, None, None, None]
    return wt.reshape(3, cout, 9 * cin).astype(compute_dtype)


def _vmem_estimate(td, H, W, Cin, Cmid, Cout, cd_bytes, out_bytes):
    S_h, S_d = W + 2, (H + 2) * (W + 2)
    XW = (td + 4) * S_d
    L_h = (td + 1) * S_d + (H - 1) * S_h + W
    L_o = td * S_d
    HP = _round_up((td + 2) * S_d + 2 * S_h + 2, 128)
    est = 0
    est += 2 * Cin * XW * cd_bytes                          # double-buffered input block
    est += 2 * Cout * L_o * out_bytes                       # double-buffered output block
    est += 2 * L_h * 4                                      # mask block
    est += 2 * 27 * Cmid * (Cin + Cout) * cd_bytes + 2 * (Cmid + Cout) * 4   # weights/bias
    est += Cmid * HP * cd_bytes                             # hslab scratch
    est += 9 * Cin * L_h * cd_bytes + 9 * Cmid * L_o * cd_bytes              # im2col RHS temps
    est += 2 * Cmid * L_h * 4 + Cout * L_o * 4              # f32 accumulators
    return est


def _choose_td(D, H, W, Cin, Cmid, Cout, cd_bytes, out_bytes, budget):
    for td in range(min(D, 32), 0, -1):
        if _vmem_estimate(td, H, W, Cin, Cmid, Cout, cd_bytes, out_bytes) <= budget:
            return td
    return 1


def basic_block_forward(x, params, *, compute_dtype=jnp.bfloat16, td=None,
                        vmem_budget_bytes=40 * 1024 * 1024):
    """x: (N, C, D, H, W).  Returns (N, C, D, H, W) in x.dtype."""
    N, Cin, D, H, W = x.shape
    Cmid = params["conv1_w"].shape[0]
    Cout = params["conv2_w"].shape[0]
    assert Cout == Cin, "identity residual requires inplanes == planes"

    cd_bytes = jnp.dtype(compute_dtype).itemsize
    out_bytes = jnp.dtype(x.dtype).itemsize
    if td is None:   # largest D-tile whose resident footprint fits the VMEM budget (v7x-safe)
        td = _choose_td(D, H, W, Cin, Cmid, Cout, cd_bytes, out_bytes, vmem_budget_bytes)
    td = max(1, min(td, D))
    T = -(-D // td)                               # number of D tiles

    # Padded-slab geometry (halo = 1 in H/W, 2 in D on each side of a tile window).
    S_h, S_d = W + 2, (H + 2) * (W + 2)
    XW = (td + 4) * S_d                           # input window lanes
    L_h = (td + 1) * S_d + (H - 1) * S_h + W      # conv1 output slab (TD+2 h-planes)
    L_o = td * S_d                                # conv2 output slab (TD planes)
    HP = _round_up((td + 2) * S_d + 2 * S_h + 2, 128)
    HOFF = S_h + 1                                # h-slab interior store offset
    ROFF = 2 * S_d + S_h + 1                      # residual offset inside the window

    # --- fold BN into the conv weights (host side, hoisted casts) ------------
    scale1, shift1 = _fold_bn(params["bn1_gamma"], params["bn1_beta"],
                              params["bn1_mean"], params["bn1_var"])
    scale2, shift2 = _fold_bn(params["bn2_gamma"], params["bn2_beta"],
                              params["bn2_mean"], params["bn2_var"])
    w1 = _fold_conv_weight(params["conv1_w"], scale1, compute_dtype)   # (3, Cmid, 9*Cin)
    w2 = _fold_conv_weight(params["conv2_w"], scale2, compute_dtype)   # (3, Cout, 9*Cmid)
    b1 = shift1.reshape(Cmid, 1).astype(jnp.float32)
    b2 = shift2.reshape(Cout, 1).astype(jnp.float32)

    # --- pre-pad + window x with XLA (no in-kernel scatter loops) ------------
    xp = jnp.pad(x, ((0, 0), (0, 0), (2, T * td - D + 2), (1, 1), (1, 1)))
    xp = xp.astype(compute_dtype)
    windows = [xp[:, :, t * td:t * td + td + 4] for t in range(T)]
    xt = jnp.stack(windows, axis=1).reshape(N, T, Cin, XW)

    # --- per-tile validity mask for the intermediate activation --------------
    pos = jnp.arange(L_h, dtype=jnp.int32)
    j = pos // S_d
    r = (pos % S_d) // S_h
    c = pos % S_h
    dplane = jnp.arange(T, dtype=jnp.int32)[:, None] * td - 1 + j[None, :]
    valid = (r[None, :] < H) & (c[None, :] < W) & (dplane >= 0) & (dplane < D)
    mask = valid.astype(jnp.float32).reshape(T, 1, L_h)

    kernel = functools.partial(
        _basic_block_kernel, S_h=S_h, S_d=S_d, L_h=L_h, L_o=L_o,
        HOFF=HOFF, ROFF=ROFF, HP=HP, compute_dtype=compute_dtype)

    est = _vmem_estimate(td, H, W, Cin, Cmid, Cout, cd_bytes, out_bytes)
    vmem_limit = int(min(96 * 2**20, max(32 * 2**20, 2 * est)))

    out = pl.pallas_call(
        kernel,
        out_shape=jax.ShapeDtypeStruct((N, T, Cout, L_o), x.dtype),
        grid=(N, T),
        in_specs=[
            pl.BlockSpec((None, 1, L_h), lambda n, t: (t, 0, 0)),          # mask
            pl.BlockSpec((None, None, Cin, XW), lambda n, t: (n, t, 0, 0)),  # x windows
            pl.BlockSpec((3, Cmid, 9 * Cin), lambda n, t: (0, 0, 0)),        # w1
            pl.BlockSpec((Cmid, 1), lambda n, t: (0, 0)),                    # b1
            pl.BlockSpec((3, Cout, 9 * Cmid), lambda n, t: (0, 0, 0)),       # w2
            pl.BlockSpec((Cout, 1), lambda n, t: (0, 0)),                    # b2
        ],
        out_specs=pl.BlockSpec((None, None, Cout, L_o), lambda n, t: (n, t, 0, 0)),
        scratch_shapes=[pltpu.VMEM((Cmid, HP), compute_dtype)],
        compiler_params=pltpu.CompilerParams(
            dimension_semantics=("parallel", "parallel"),
            vmem_limit_bytes=vmem_limit),
    )(mask, xt, w1, b1, w2, b2)

    # Crop the padded-slab output back to (N, C, D, H, W) with XLA.
    out = out.reshape(N, T, Cout, td, H + 2, W + 2)[:, :, :, :, :H, :W]
    out = out.transpose(0, 2, 1, 3, 4, 5).reshape(N, Cout, T * td, H, W)
    return out[:, :, :D]


# ----------------------------------------------------------------------------
# Pure-JAX reference (for the correctness check)
# ----------------------------------------------------------------------------
def _ref_forward(x, params):
    def conv(x, w):
        return lax.conv_general_dilated(
            x, w, window_strides=(1, 1, 1), padding=[(1, 1)] * 3,
            dimension_numbers=("NCDHW", "OIDHW", "NCDHW"))

    def bn(x, g, b, m, v):
        return (x - m[None, :, None, None, None]) / jnp.sqrt(
            v[None, :, None, None, None] + EPS) * g[None, :, None, None, None] \
            + b[None, :, None, None, None]

    out = conv(x, params["conv1_w"])
    out = jnp.maximum(bn(out, params["bn1_gamma"], params["bn1_beta"],
                         params["bn1_mean"], params["bn1_var"]), 0.0)
    out = conv(out, params["conv2_w"])
    out = bn(out, params["bn2_gamma"], params["bn2_beta"],
             params["bn2_mean"], params["bn2_var"])
    return jnp.maximum(out + x, 0.0)


# ----------------------------------------------------------------------------
if __name__ == "__main__":
    # Small shapes: batch=2, inplanes=planes=4, spatial 8x8x8 (NCDHW).
    N, C, D, H, W = 2, 4, 8, 8, 8
    key = jax.random.PRNGKey(0)
    ks = jax.random.split(key, 11)

    x = jax.random.normal(ks[0], (N, C, D, H, W), jnp.float32)
    params = {
        "conv1_w": jax.random.normal(ks[1], (C, C, 3, 3, 3), jnp.float32) * 0.1,
        "conv2_w": jax.random.normal(ks[2], (C, C, 3, 3, 3), jnp.float32) * 0.1,
        "bn1_gamma": jax.random.uniform(ks[3], (C,), jnp.float32, 0.5, 1.5),
        "bn1_beta": jax.random.normal(ks[4], (C,), jnp.float32) * 0.1,
        "bn1_mean": jax.random.normal(ks[5], (C,), jnp.float32) * 0.1,
        "bn1_var": jax.random.uniform(ks[6], (C,), jnp.float32, 0.5, 1.5),
        "bn2_gamma": jax.random.uniform(ks[7], (C,), jnp.float32, 0.5, 1.5),
        "bn2_beta": jax.random.normal(ks[8], (C,), jnp.float32) * 0.1,
        "bn2_mean": jax.random.normal(ks[9], (C,), jnp.float32) * 0.1,
        "bn2_var": jax.random.uniform(ks[10], (C,), jnp.float32, 0.5, 1.5),
    }

    ref = jax.block_until_ready(_ref_forward(x, params))

    # Exact (f32) path with an explicit non-dividing D-tile (td=3 -> 3 tiles):
    # exercises the inter-tile halo, per-tile D-masking and the output crop.
    out_f32 = jax.block_until_ready(
        basic_block_forward(x, params, compute_dtype=jnp.float32, td=3))
    assert out_f32.shape == (N, C, D, H, W)
    err32 = float(jnp.max(jnp.abs(out_f32 - ref)))
    assert jnp.allclose(out_f32, ref, atol=5e-4, rtol=5e-4), f"f32 max abs err {err32}"

    # Production default: bf16 compute / bf16 scratch with f32 accumulation.
    out_bf = jax.block_until_ready(basic_block_forward(x, params))
    assert out_bf.shape == (N, C, D, H, W)
    errbf = float(jnp.max(jnp.abs(out_bf - ref)))
    assert jnp.allclose(out_bf, ref, atol=8e-2, rtol=8e-2), f"bf16 max abs err {errbf}"

    print("KERNEL_OK")
</pallas_src>

<mosaic_0001>
module attributes {stable_mosaic.version = 11 : i64} {
  func.func @_basic_block_kernel(%arg0: i32, %arg1: i32, %arg2: memref<1x1x478xf32, #tpu.memory_space<vmem>>, %arg3: memref<1x1x4x700xf32, #tpu.memory_space<vmem>>, %arg4: memref<3x4x36xf32, #tpu.memory_space<vmem>>, %arg5: memref<4x1xf32, #tpu.memory_space<vmem>>, %arg6: memref<3x4x36xf32, #tpu.memory_space<vmem>>, %arg7: memref<4x1xf32, #tpu.memory_space<vmem>>, %arg8: memref<1x1x4x300xf32, #tpu.memory_space<vmem>>, %arg9: memref<4x640xf32, #tpu.memory_space<vmem>>) attributes {dimension_semantics = [#tpu.dimension_semantics<parallel>, #tpu.dimension_semantics<parallel>], iteration_bounds = array<i64: 2, 3>, scalar_prefetch = 0 : i64, scratch_operands = 1 : i64, tpu.core_type = #tpu.core_type<tc>, window_params = [{transform_indices = @transform_0, window_bounds = array<i64: 1, 1, 478>}, {transform_indices = @transform_1, window_bounds = array<i64: 1, 1, 4, 700>}, {pipeline_mode = #tpu.pipeline_mode<synchronous>, transform_indices = @transform_2, window_bounds = array<i64: 3, 4, 36>}, {pipeline_mode = #tpu.pipeline_mode<synchronous>, transform_indices = @transform_3, window_bounds = array<i64: 4, 1>}, {pipeline_mode = #tpu.pipeline_mode<synchronous>, transform_indices = @transform_4, window_bounds = array<i64: 3, 4, 36>}, {pipeline_mode = #tpu.pipeline_mode<synchronous>, transform_indices = @transform_5, window_bounds = array<i64: 4, 1>}, {transform_indices = @transform_6, window_bounds = array<i64: 1, 1, 4, 300>}]} {
    %c0 = arith.constant 0 : index
    %c0_0 = arith.constant 0 : index
    %c0_1 = arith.constant 0 : index
    %c0_2 = arith.constant 0 : index
    %0 = vector.load %arg3[%c0, %c0_0, %c0_1, %c0_2] : memref<1x1x4x700xf32, #tpu.memory_space<vmem>>, vector<1x1x4x478xf32>
    %1 = vector.shape_cast %0 : vector<1x1x4x478xf32> to vector<4x478xf32>
    %c0_3 = arith.constant 0 : index
    %c0_4 = arith.constant 0 : index
    %c0_5 = arith.constant 0 : index
    %c1 = arith.constant 1 : index
    %2 = vector.load %arg3[%c0_3, %c0_4, %c0_5, %c1] : memref<1x1x4x700xf32, #tpu.memory_space<vmem>>, vector<1x1x4x478xf32>
    %3 = vector.shape_cast %2 : vector<1x1x4x478xf32> to vector<4x478xf32>
    %c0_6 = arith.constant 0 : index
    %c0_7 = arith.constant 0 : index
    %c0_8 = arith.constant 0 : index
    %c2 = arith.constant 2 : index
    %4 = vector.load %arg3[%c0_6, %c0_7, %c0_8, %c2] : memref<1x1x4x700xf32, #tpu.memory_space<vmem>>, vector<1x1x4x478xf32>
    %5 = vector.shape_cast %4 : vector<1x1x4x478xf32> to vector<4x478xf32>
    %c0_9 = arith.constant 0 : index
    %c0_10 = arith.constant 0 : index
    %c0_11 = arith.constant 0 : index
    %c10 = arith.constant 10 : index
    %6 = vector.load %arg3[%c0_9, %c0_10, %c0_11, %c10] : memref<1x1x4x700xf32, #tpu.memory_space<vmem>>, vector<1x1x4x478xf32>
    %7 = vector.shape_cast %6 : vector<1x1x4x478xf32> to vector<4x478xf32>
    %c0_12 = arith.constant 0 : index
    %c0_13 = arith.constant 0 : index
    %c0_14 = arith.constant 0 : index
    %c11 = arith.constant 11 : index
    %8 = vector.load %arg3[%c0_12, %c0_13, %c0_14, %c11] : memref<1x1x4x700xf32, #tpu.memory_space<vmem>>, vector<1x1x4x478xf32>
    %9 = vector.shape_cast %8 : vector<1x1x4x478xf32> to vector<4x478xf32>
    %c0_15 = arith.constant 0 : index
    %c0_16 = arith.constant 0 : index
    %c0_17 = arith.constant 0 : index
    %c12 = arith.constant 12 : index
    %10 = vector.load %arg3[%c0_15, %c0_16, %c0_17, %c12] : memref<1x1x4x700xf32, #tpu.memory_space<vmem>>, vector<1x1x4x478xf32>
    %11 = vector.shape_cast %10 : vector<1x1x4x478xf32> to vector<4x478xf32>
    %c0_18 = arith.constant 0 : index
    %c0_19 = arith.constant 0 : index
    %c0_20 = arith.constant 0 : index
    %c20 = arith.constant 20 : index
    %12 = vector.load %arg3[%c0_18, %c0_19, %c0_20, %c20] : memref<1x1x4x700xf32, #tpu.memory_space<vmem>>, vector<1x1x4x478xf32>
    %13 = vector.shape_cast %12 : vector<1x1x4x478xf32> to vector<4x478xf32>
    %c0_21 = arith.constant 0 : index
    %c0_22 = arith.constant 0 : index
    %c0_23 = arith.constant 0 : index
    %c21 = arith.constant 21 : index
    %14 = vector.load %arg3[%c0_21, %c0_22, %c0_23, %c21] : memref<1x1x4x700xf32, #tpu.memory_space<vmem>>, vector<1x1x4x478xf32>
    %15 = vector.shape_cast %14 : vector<1x1x4x478xf32> to vector<4x478xf32>
    %c0_24 = arith.constant 0 : index
    %c0_25 = arith.constant 0 : index
    %c0_26 = arith.constant 0 : index
    %c22 = arith.constant 22 : index
    %16 = vector.load %arg3[%c0_24, %c0_25, %c0_26, %c22] : memref<1x1x4x700xf32, #tpu.memory_space<vmem>>, vector<1x1x4x478xf32>
    %17 = vector.shape_cast %16 : vector<1x1x4x478xf32> to vector<4x478xf32>
    %18 = tpu.concatenate %1, %3, %5, %7, %9, %11, %13, %15, %17 in 0 : vector<4x478xf32>, vector<4x478xf32>, vector<4x478xf32>, vector<4x478xf32>, vector<4x478xf32>, vector<4x478xf32>, vector<4x478xf32>, vector<4x478xf32>, vector<4x478xf32> -> vector<36x478xf32>
    %c0_27 = arith.constant 0 : index
    %c0_28 = arith.constant 0 : index
    %c0_29 = arith.constant 0 : index
    %19 = vector.load %arg4[%c0_27, %c0_28, %c0_29] : memref<3x4x36xf32, #tpu.memory_space<vmem>>, vector<1x4x36xf32>
    %20 = vector.shape_cast %19 : vector<1x4x36xf32> to vector<4x36xf32>
    %cst = arith.constant dense<0.000000e+00> : vector<4x478xf32>
    %21 = tpu.matmul %20, %18, %cst {dimension_numbers = #tpu.dot_dimension_numbers<[1], [0], [0], [1], [0, 0, 1, 1], [], []>} : vector<4x36xf32>, vector<36x478xf32>, vector<4x478xf32> -> vector<4x478xf32>
    %c0_30 = arith.constant 0 : index
    %c0_31 = arith.constant 0 : index
    %c0_32 = arith.constant 0 : index
    %c100 = arith.constant 100 : index
    %22 = vector.load %arg3[%c0_30, %c0_31, %c0_32, %c100] : memref<1x1x4x700xf32, #tpu.memory_space<vmem>>, vector<1x1x4x478xf32>
    %23 = vector.shape_cast %22 : vector<1x1x4x478xf32> to vector<4x478xf32>
    %c0_33 = arith.constant 0 : index
    %c0_34 = arith.constant 0 : index
    %c0_35 = arith.constant 0 : index
    %c101 = arith.constant 101 : index
    %24 = vector.load %arg3[%c0_33, %c0_34, %c0_35, %c101] : memref<1x1x4x700xf32, #tpu.memory_space<vmem>>, vector<1x1x4x478xf32>
    %25 = vector.shape_cast %24 : vector<1x1x4x478xf32> to vector<4x478xf32>
    %c0_36 = arith.constant 0 : index
    %c0_37 = arith.constant 0 : index
    %c0_38 = arith.constant 0 : index
    %c102 = arith.constant 102 : index
    %26 = vector.load %arg3[%c0_36, %c0_37, %c0_38, %c102] : memref<1x1x4x700xf32, #tpu.memory_space<vmem>>, vector<1x1x4x478xf32>
    %27 = vector.shape_cast %26 : vector<1x1x4x478xf32> to vector<4x478xf32>
    %c0_39 = arith.constant 0 : index
    %c0_40 = arith.constant 0 : index
    %c0_41 = arith.constant 0 : index
    %c110 = arith.constant 110 : index
    %28 = vector.load %arg3[%c0_39, %c0_40, %c0_41, %c110] : memref<1x1x4x700xf32, #tpu.memory_space<vmem>>, vector<1x1x4x478xf32>
    %29 = vector.shape_cast %28 : vector<1x1x4x478xf32> to vector<4x478xf32>
    %c0_42 = arith.constant 0 : index
    %c0_43 = arith.constant 0 : index
    %c0_44 = arith.constant 0 : index
    %c111 = arith.constant 111 : index
    %30 = vector.load %arg3[%c0_42, %c0_43, %c0_44, %c111] : memref<1x1x4x700xf32, #tpu.memory_space<vmem>>, vector<1x1x4x478xf32>
    %31 = vector.shape_cast %30 : vector<1x1x4x478xf32> to vector<4x478xf32>
    %c0_45 = arith.constant 0 : index
    %c0_46 = arith.constant 0 : index
    %c0_47 = arith.constant 0 : index
    %c112 = arith.constant 112 : index
    %32 = vector.load %arg3[%c0_45, %c0_46, %c0_47, %c112] : memref<1x1x4x700xf32, #tpu.memory_space<vmem>>, vector<1x1x4x478xf32>
    %33 = vector.shape_cast %32 : vector<1x1x4x478xf32> to vector<4x478xf32>
    %c0_48 = arith.constant 0 : index
    %c0_49 = arith.constant 0 : index
    %c0_50 = arith.constant 0 : index
    %c120 = arith.constant 120 : index
    %34 = vector.load %arg3[%c0_48, %c0_49, %c0_50, %c120] : memref<1x1x4x700xf32, #tpu.memory_space<vmem>>, vector<1x1x4x478xf32>
    %35 = vector.shape_cast %34 : vector<1x1x4x478xf32> to vector<4x478xf32>
    %c0_51 = arith.constant 0 : index
    %c0_52 = arith.constant 0 : index
    %c0_53 = arith.constant 0 : index
    %c121 = arith.constant 121 : index
    %36 = vector.load %arg3[%c0_51, %c0_52, %c0_53, %c121] : memref<1x1x4x700xf32, #tpu.memory_space<vmem>>, vector<1x1x4x478xf32>
    %37 = vector.shape_cast %36 : vector<1x1x4x478xf32> to vector<4x478xf32>
    %c0_54 = arith.constant 0 : index
    %c0_55 = arith.constant 0 : index
    %c0_56 = arith.constant 0 : index
    %c122 = arith.constant 122 : index
    %38 = vector.load %arg3[%c0_54, %c0_55, %c0_56, %c122] : memref<1x1x4x700xf32, #tpu.memory_space<vmem>>, vector<1x1x4x478xf32>
    %39 = vector.shape_cast %38 : vector<1x1x4x478xf32> to vector<4x478xf32>
    %40 = tpu.concatenate %23, %25, %27, %29, %31, %33, %35, %37, %39 in 0 : vector<4x478xf32>, vector<4x478xf32>, vector<4x478xf32>, vector<4x478xf32>, vector<4x478xf32>, vector<4x478xf32>, vector<4x478xf32>, vector<4x478xf32>, vector<4x478xf32> -> vector<36x478xf32>
    %c1_57 = arith.constant 1 : index
    %c0_58 = arith.constant 0 : index
    %c0_59 = arith.constant 0 : index
    %41 = vector.load %arg4[%c1_57, %c0_58, %c0_59] : memref<3x4x36xf32, #tpu.memory_space<vmem>>, vector<1x4x36xf32>
    %42 = vector.shape_cast %41 : vector<1x4x36xf32> to vector<4x36xf32>
    %cst_60 = arith.constant dense<0.000000e+00> : vector<4x478xf32>
    %43 = tpu.matmul %42, %40, %cst_60 {dimension_numbers = #tpu.dot_dimension_numbers<[1], [0], [0], [1], [0, 0, 1, 1], [], []>} : vector<4x36xf32>, vector<36x478xf32>, vector<4x478xf32> -> vector<4x478xf32>
    %44 = arith.addf %21, %43 : vector<4x478xf32>
    %c0_61 = arith.constant 0 : index
    %c0_62 = arith.constant 0 : index
    %c0_63 = arith.constant 0 : index
    %c200 = arith.constant 200 : index
    %45 = vector.load %arg3[%c0_61, %c0_62, %c0_63, %c200] : memref<1x1x4x700xf32, #tpu.memory_space<vmem>>, vector<1x1x4x478xf32>
    %46 = vector.shape_cast %45 : vector<1x1x4x478xf32> to vector<4x478xf32>
    %c0_64 = arith.constant 0 : index
    %c0_65 = arith.constant 0 : index
    %c0_66 = arith.constant 0 : index
    %c201 = arith.constant 201 : index
    %47 = vector.load %arg3[%c0_64, %c0_65, %c0_66, %c201] : memref<1x1x4x700xf32, #tpu.memory_space<vmem>>, vector<1x1x4x478xf32>
    %48 = vector.shape_cast %47 : vector<1x1x4x478xf32> to vector<4x478xf32>
    %c0_67 = arith.constant 0 : index
    %c0_68 = arith.constant 0 : index
    %c0_69 = arith.constant 0 : index
    %c202 = arith.constant 202 : index
    %49 = vector.load %arg3[%c0_67, %c0_68, %c0_69, %c202] : memref<1x1x4x700xf32, #tpu.memory_space<vmem>>, vector<1x1x4x478xf32>
    %50 = vector.shape_cast %49 : vector<1x1x4x478xf32> to vector<4x478xf32>
    %c0_70 = arith.constant 0 : index
    %c0_71 = arith.constant 0 : index
    %c0_72 = arith.constant 0 : index
    %c210 = arith.constant 210 : index
    %51 = vector.load %arg3[%c0_70, %c0_71, %c0_72, %c210] : memref<1x1x4x700xf32, #tpu.memory_space<vmem>>, vector<1x1x4x478xf32>
    %52 = vector.shape_cast %51 : vector<1x1x4x478xf32> to vector<4x478xf32>
    %c0_73 = arith.constant 0 : index
    %c0_74 = arith.constant 0 : index
    %c0_75 = arith.constant 0 : index
    %c211 = arith.constant 211 : index
    %53 = vector.load %arg3[%c0_73, %c0_74, %c0_75, %c211] : memref<1x1x4x700xf32, #tpu.memory_space<vmem>>, vector<1x1x4x478xf32>
    %54 = vector.shape_cast %53 : vector<1x1x4x478xf32> to vector<4x478xf32>
    %c0_76 = arith.constant 0 : index
    %c0_77 = arith.constant 0 : index
    %c0_78 = arith.constant 0 : index
    %c212 = arith.constant 212 : index
    %55 = vector.load %arg3[%c0_76, %c0_77, %c0_78, %c212] : memref<1x1x4x700xf32, #tpu.memory_space<vmem>>, vector<1x1x4x478xf32>
    %56 = vector.shape_cast %55 : vector<1x1x4x478xf32> to vector<4x478xf32>
    %c0_79 = arith.constant 0 : index
    %c0_80 = arith.constant 0 : index
    %c0_81 = arith.constant 0 : index
    %c220 = arith.constant 220 : index
    %57 = vector.load %arg3[%c0_79, %c0_80, %c0_81, %c220] : memref<1x1x4x700xf32, #tpu.memory_space<vmem>>, vector<1x1x4x478xf32>
    %58 = vector.shape_cast %57 : vector<1x1x4x478xf32> to vector<4x478xf32>
    %c0_82 = arith.constant 0 : index
    %c0_83 = arith.constant 0 : index
    %c0_84 = arith.constant 0 : index
    %c221 = arith.constant 221 : index
    %59 = vector.load %arg3[%c0_82, %c0_83, %c0_84, %c221] : memref<1x1x4x700xf32, #tpu.memory_space<vmem>>, vector<1x1x4x478xf32>
    %60 = vector.shape_cast %59 : vector<1x1x4x478xf32> to vector<4x478xf32>
    %c0_85 = arith.constant 0 : index
    %c0_86 = arith.constant 0 : index
    %c0_87 = arith.constant 0 : index
    %c222 = arith.constant 222 : index
    %61 = vector.load %arg3[%c0_85, %c0_86, %c0_87, %c222] : memref<1x1x4x700xf32, #tpu.memory_space<vmem>>, vector<1x1x4x478xf32>
    %62 = vector.shape_cast %61 : vector<1x1x4x478xf32> to vector<4x478xf32>
    %63 = tpu.concatenate %46, %48, %50, %52, %54, %56, %58, %60, %62 in 0 : vector<4x478xf32>, vector<4x478xf32>, vector<4x478xf32>, vector<4x478xf32>, vector<4x478xf32>, vector<4x478xf32>, vector<4x478xf32>, vector<4x478xf32>, vector<4x478xf32> -> vector<36x478xf32>
    %c2_88 = arith.constant 2 : index
    %c0_89 = arith.constant 0 : index
    %c0_90 = arith.constant 0 : index
    %64 = vector.load %arg4[%c2_88, %c0_89, %c0_90] : memref<3x4x36xf32, #tpu.memory_space<vmem>>, vector<1x4x36xf32>
    %65 = vector.shape_cast %64 : vector<1x4x36xf32> to vector<4x36xf32>
    %cst_91 = arith.constant dense<0.000000e+00> : vector<4x478xf32>
    %66 = tpu.matmul %65, %63, %cst_91 {dimension_numbers = #tpu.dot_dimension_numbers<[1], [0], [0], [1], [0, 0, 1, 1], [], []>} : vector<4x36xf32>, vector<36x478xf32>, vector<4x478xf32> -> vector<4x478xf32>
    %67 = arith.addf %44, %66 : vector<4x478xf32>
    %c0_92 = arith.constant 0 : index
    %c0_93 = arith.constant 0 : index
    %68 = vector.load %arg5[%c0_92, %c0_93] : memref<4x1xf32, #tpu.memory_space<vmem>>, vector<4x1xf32>
    %69 = vector.broadcast %68 : vector<4x1xf32> to vector<4x478xf32>
    %70 = arith.addf %67, %69 : vector<4x478xf32>
    %cst_94 = arith.constant 0.000000e+00 : f32
    %71 = vector.broadcast %cst_94 : f32 to vector<4x478xf32>
    %72 = arith.maximumf %70, %71 : vector<4x478xf32>
    %c0_95 = arith.constant 0 : index
    %c0_96 = arith.constant 0 : index
    %c0_97 = arith.constant 0 : index
    %73 = vector.load %arg2[%c0_95, %c0_96, %c0_97] : memref<1x1x478xf32, #tpu.memory_space<vmem>>, vector<1x1x478xf32>
    %74 = vector.shape_cast %73 : vector<1x1x478xf32> to vector<1x478xf32>
    %75 = vector.broadcast %74 : vector<1x478xf32> to vector<4x478xf32>
    %76 = arith.mulf %72, %75 : vector<4x478xf32>
    %cst_98 = arith.constant 0.000000e+00 : f32
    %77 = vector.broadcast %cst_98 : f32 to vector<4x11xf32>
    %c0_99 = arith.constant 0 : index
    %c0_100 = arith.constant 0 : index
    %78 = vector.load %arg9[%c0_99, %c0_100] : memref<4x640xf32, #tpu.memory_space<vmem>>, vector<4x11xf32>
    tpu.vector_store %arg9[%c0_99, %c0_100], %77 {strides = array<i32>} : memref<4x640xf32, #tpu.memory_space<vmem>>, vector<4x11xf32>,
    %cst_101 = arith.constant 0.000000e+00 : f32
    %79 = vector.broadcast %cst_101 : f32 to vector<4x151xf32>
    %c0_102 = arith.constant 0 : index
    %c489 = arith.constant 489 : index
    %80 = vector.load %arg9[%c0_102, %c489] : memref<4x640xf32, #tpu.memory_space<vmem>>, vector<4x151xf32>
    tpu.vector_store %arg9[%c0_102, %c489], %79 {strides = array<i32>} : memref<4x640xf32, #tpu.memory_space<vmem>>, vector<4x151xf32>,
    %c0_103 = arith.constant 0 : index
    %c11_104 = arith.constant 11 : index
    %81 = vector.load %arg9[%c0_103, %c11_104] : memref<4x640xf32, #tpu.memory_space<vmem>>, vector<4x478xf32>
    tpu.vector_store %arg9[%c0_103, %c11_104], %76 {strides = array<i32>} : memref<4x640xf32, #tpu.memory_space<vmem>>, vector<4x478xf32>,
    %c0_105 = arith.constant 0 : index
    %c0_106 = arith.constant 0 : index
    %82 = vector.load %arg9[%c0_105, %c0_106] : memref<4x640xf32, #tpu.memory_space<vmem>>, vector<4x300xf32>
    %c0_107 = arith.constant 0 : index
    %c1_108 = arith.constant 1 : index
    %83 = vector.load %arg9[%c0_107, %c1_108] : memref<4x640xf32, #tpu.memory_space<vmem>>, vector<4x300xf32>
    %c0_109 = arith.constant 0 : index
    %c2_110 = arith.constant 2 : index
    %84 = vector.load %arg9[%c0_109, %c2_110] : memref<4x640xf32, #tpu.memory_space<vmem>>, vector<4x300xf32>
    %c0_111 = arith.constant 0 : index
    %c10_112 = arith.constant 10 : index
    %85 = vector.load %arg9[%c0_111, %c10_112] : memref<4x640xf32, #tpu.memory_space<vmem>>, vector<4x300xf32>
    %c0_113 = arith.constant 0 : index
    %c11_114 = arith.constant 11 : index
    %86 = vector.load %arg9[%c0_113, %c11_114] : memref<4x640xf32, #tpu.memory_space<vmem>>, vector<4x300xf32>
    %c0_115 = arith.constant 0 : index
    %c12_116 = arith.constant 12 : index
    %87 = vector.load %arg9[%c0_115, %c12_116] : memref<4x640xf32, #tpu.memory_space<vmem>>, vector<4x300xf32>
    %c0_117 = arith.constant 0 : index
    %c20_118 = arith.constant 20 : index
    %88 = vector.load %arg9[%c0_117, %c20_118] : memref<4x640xf32, #tpu.memory_space<vmem>>, vector<4x300xf32>
    %c0_119 = arith.constant 0 : index
    %c21_120 = arith.constant 21 : index
    %89 = vector.load %arg9[%c0_119, %c21_120] : memref<4x640xf32, #tpu.memory_space<vmem>>, vector<4x300xf32>
    %c0_121 = arith.constant 0 : index
    %c22_122 = arith.constant 22 : index
    %90 = vector.load %arg9[%c0_121, %c22_122] : memref<4x640xf32, #tpu.memory_space<vmem>>, vector<4x300xf32>
    %91 = tpu.concatenate %82, %83, %84, %85, %86, %87, %88, %89, %90 in 0 : vector<4x300xf32>, vector<4x300xf32>, vector<4x300xf32>, vector<4x300xf32>, vector<4x300xf32>, vector<4x300xf32>, vector<4x300xf32>, vector<4x300xf32>, vector<4x300xf32> -> vector<36x300xf32>
    %c0_123 = arith.constant 0 : index
    %c0_124 = arith.constant 0 : index
    %c0_125 = arith.constant 0 : index
    %92 = vector.load %arg6[%c0_123, %c0_124, %c0_125] : memref<3x4x36xf32, #tpu.memory_space<vmem>>, vector<1x4x36xf32>
    %93 = vector.shape_cast %92 : vector<1x4x36xf32> to vector<4x36xf32>
    %cst_126 = arith.constant dense<0.000000e+00> : vector<4x300xf32>
    %94 = tpu.matmul %93, %91, %cst_126 {dimension_numbers = #tpu.dot_dimension_numbers<[1], [0], [0], [1], [0, 0, 1, 1], [], []>} : vector<4x36xf32>, vector<36x300xf32>, vector<4x300xf32> -> vector<4x300xf32>
    %c0_127 = arith.constant 0 : index
    %c100_128 = arith.constant 100 : index
    %95 = vector.load %arg9[%c0_127, %c100_128] : memref<4x640xf32, #tpu.memory_space<vmem>>, vector<4x300xf32>
    %c0_129 = arith.constant 0 : index
    %c101_130 = arith.constant 101 : index
    %96 = vector.load %arg9[%c0_129, %c101_130] : memref<4x640xf32, #tpu.memory_space<vmem>>, vector<4x300xf32>
    %c0_131 = arith.constant 0 : index
    %c102_132 = arith.constant 102 : index
    %97 = vector.load %arg9[%c0_131, %c102_132] : memref<4x640xf32, #tpu.memory_space<vmem>>, vector<4x300xf32>
    %c0_133 = arith.constant 0 : index
    %c110_134 = arith.constant 110 : index
    %98 = vector.load %arg9[%c0_133, %c110_134] : memref<4x640xf32, #tpu.memory_space<vmem>>, vector<4x300xf32>
    %c0_135 = arith.constant 0 : index
    %c111_136 = arith.constant 111 : index
    %99 = vector.load %arg9[%c0_135, %c111_136] : memref<4x640xf32, #tpu.memory_space<vmem>>, vector<4x300xf32>
    %c0_137 = arith.constant 0 : index
    %c112_138 = arith.constant 112 : index
    %100 = vector.load %arg9[%c0_137, %c112_138] : memref<4x640xf32, #tpu.memory_space<vmem>>, vector<4x300xf32>
    %c0_139 = arith.constant 0 : index
    %c120_140 = arith.constant 120 : index
    %101 = vector.load %arg9[%c0_139, %c120_140] : memref<4x640xf32, #tpu.memory_space<vmem>>, vector<4x300xf32>
    %c0_141 = arith.constant 0 : index
    %c121_142 = arith.constant 121 : index
    %102 = vector.load %arg9[%c0_141, %c121_142] : memref<4x640xf32, #tpu.memory_space<vmem>>, vector<4x300xf32>
    %c0_143 = arith.constant 0 : index
    %c122_144 = arith.constant 122 : index
    %103 = vector.load %arg9[%c0_143, %c122_144] : memref<4x640xf32, #tpu.memory_space<vmem>>, vector<4x300xf32>
    %104 = tpu.concatenate %95, %96, %97, %98, %99, %100, %101, %102, %103 in 0 : vector<4x300xf32>, vector<4x300xf32>, vector<4x300xf32>, vector<4x300xf32>, vector<4x300xf32>, vector<4x300xf32>, vector<4x300xf32>, vector<4x300xf32>, vector<4x300xf32> -> vector<36x300xf32>
    %c1_145 = arith.constant 1 : index
    %c0_146 = arith.constant 0 : index
    %c0_147 = arith.constant 0 : index
    %105 = vector.load %arg6[%c1_145, %c0_146, %c0_147] : memref<3x4x36xf32, #tpu.memory_space<vmem>>, vector<1x4x36xf32>
    %106 = vector.shape_cast %105 : vector<1x4x36xf32> to vector<4x36xf32>
    %cst_148 = arith.constant dense<0.000000e+00> : vector<4x300xf32>
    %107 = tpu.matmul %106, %104, %cst_148 {dimension_numbers = #tpu.dot_dimension_numbers<[1], [0], [0], [1], [0, 0, 1, 1], [], []>} : vector<4x36xf32>, vector<36x300xf32>, vector<4x300xf32> -> vector<4x300xf32>
    %108 = arith.addf %94, %107 : vector<4x300xf32>
    %c0_149 = arith.constant 0 : index
    %c200_150 = arith.constant 200 : index
    %109 = vector.load %arg9[%c0_149, %c200_150] : memref<4x640xf32, #tpu.memory_space<vmem>>, vector<4x300xf32>
    %c0_151 = arith.constant 0 : index
    %c201_152 = arith.constant 201 : index
    %110 = vector.load %arg9[%c0_151, %c201_152] : memref<4x640xf32, #tpu.memory_space<vmem>>, vector<4x300xf32>
    %c0_153 = arith.constant 0 : index
    %c202_154 = arith.constant 202 : index
    %111 = vector.load %arg9[%c0_153, %c202_154] : memref<4x640xf32, #tpu.memory_space<vmem>>, vector<4x300xf32>
    %c0_155 = arith.constant 0 : index
    %c210_156 = arith.constant 210 : index
    %112 = vector.load %arg9[%c0_155, %c210_156] : memref<4x640xf32, #tpu.memory_space<vmem>>, vector<4x300xf32>
    %c0_157 = arith.constant 0 : index
    %c211_158 = arith.constant 211 : index
    %113 = vector.load %arg9[%c0_157, %c211_158] : memref<4x640xf32, #tpu.memory_space<vmem>>, vector<4x300xf32>
    %c0_159 = arith.constant 0 : index
    %c212_160 = arith.constant 212 : index
    %114 = vector.load %arg9[%c0_159, %c212_160] : memref<4x640xf32, #tpu.memory_space<vmem>>, vector<4x300xf32>
    %c0_161 = arith.constant 0 : index
    %c220_162 = arith.constant 220 : index
    %115 = vector.load %arg9[%c0_161, %c220_162] : memref<4x640xf32, #tpu.memory_space<vmem>>, vector<4x300xf32>
    %c0_163 = arith.constant 0 : index
    %c221_164 = arith.constant 221 : index
    %116 = vector.load %arg9[%c0_163, %c221_164] : memref<4x640xf32, #tpu.memory_space<vmem>>, vector<4x300xf32>
    %c0_165 = arith.constant 0 : index
    %c222_166 = arith.constant 222 : index
    %117 = vector.load %arg9[%c0_165, %c222_166] : memref<4x640xf32, #tpu.memory_space<vmem>>, vector<4x300xf32>
    %118 = tpu.concatenate %109, %110, %111, %112, %113, %114, %115, %116, %117 in 0 : vector<4x300xf32>, vector<4x300xf32>, vector<4x300xf32>, vector<4x300xf32>, vector<4x300xf32>, vector<4x300xf32>, vector<4x300xf32>, vector<4x300xf32>, vector<4x300xf32> -> vector<36x300xf32>
    %c2_167 = arith.constant 2 : index
    %c0_168 = arith.constant 0 : index
    %c0_169 = arith.constant 0 : index
    %119 = vector.load %arg6[%c2_167, %c0_168, %c0_169] : memref<3x4x36xf32, #tpu.memory_space<vmem>>, vector<1x4x36xf32>
    %120 = vector.shape_cast %119 : vector<1x4x36xf32> to vector<4x36xf32>
    %cst_170 = arith.constant dense<0.000000e+00> : vector<4x300xf32>
    %121 = tpu.matmul %120, %118, %cst_170 {dimension_numbers = #tpu.dot_dimension_numbers<[1], [0], [0], [1], [0, 0, 1, 1], [], []>} : vector<4x36xf32>, vector<36x300xf32>, vector<4x300xf32> -> vector<4x300xf32>
    %122 = arith.addf %108, %121 : vector<4x300xf32>
    %c0_171 = arith.constant 0 : index
    %c0_172 = arith.constant 0 : index
    %c0_173 = arith.constant 0 : index
    %c211_174 = arith.constant 211 : index
    %123 = vector.load %arg3[%c0_171, %c0_172, %c0_173, %c211_174] : memref<1x1x4x700xf32, #tpu.memory_space<vmem>>, vector<1x1x4x300xf32>
    %124 = vector.shape_cast %123 : vector<1x1x4x300xf32> to vector<4x300xf32>
    %c0_175 = arith.constant 0 : index
    %c0_176 = arith.constant 0 : index
    %125 = vector.load %arg7[%c0_175, %c0_176] : memref<4x1xf32, #tpu.memory_space<vmem>>, vector<4x1xf32>
    %126 = vector.broadcast %125 : vector<4x1xf32> to vector<4x300xf32>
    %127 = arith.addf %122, %126 : vector<4x300xf32>
    %128 = arith.addf %127, %124 : vector<4x300xf32>
    %cst_177 = arith.constant 0.000000e+00 : f32
    %129 = vector.broadcast %cst_177 : f32 to vector<4x300xf32>
    %130 = arith.maximumf %128, %129 : vector<4x300xf32>
    %c0_178 = arith.constant 0 : index
    %c0_179 = arith.constant 0 : index
    %c0_180 = arith.constant 0 : index
    %c0_181 = arith.constant 0 : index
    %131 = vector.load %arg8[%c0_178, %c0_179, %c0_180, %c0_181] : memref<1x1x4x300xf32, #tpu.memory_space<vmem>>, vector<1x1x4x300xf32>
    %132 = vector.shape_cast %131 : vector<1x1x4x300xf32> to vector<4x300xf32>
    %133 = vector.shape_cast %130 : vector<4x300xf32> to vector<1x1x4x300xf32>
    tpu.vector_store %arg8[%c0_178, %c0_179, %c0_180, %c0_181], %133 {strides = array<i32>} : memref<1x1x4x300xf32, #tpu.memory_space<vmem>>, vector<1x1x4x300xf32>,
    return
  }
  func.func @transform_0(%arg0: i32, %arg1: i32) -> (i32, i32, i32) {
    %c0_i32 = arith.constant 0 : i32
    %c0_i32_0 = arith.constant 0 : i32
    %c0_i32_1 = arith.constant 0 : i32
    return %arg1, %c0_i32, %c0_i32_0 : i32, i32, i32
  }
  func.func @transform_1(%arg0: i32, %arg1: i32) -> (i32, i32, i32, i32) {
    %c0_i32 = arith.constant 0 : i32
    %c0_i32_0 = arith.constant 0 : i32
    %c0_i32_1 = arith.constant 0 : i32
    return %arg0, %arg1, %c0_i32, %c0_i32_0 : i32, i32, i32, i32
  }
  func.func @transform_2(%arg0: i32, %arg1: i32) -> (i32, i32, i32) {
    %c0_i32 = arith.constant 0 : i32
    %c0_i32_0 = arith.constant 0 : i32
    %c0_i32_1 = arith.constant 0 : i32
    %c0_i32_2 = arith.constant 0 : i32
    return %c0_i32, %c0_i32_0, %c0_i32_1 : i32, i32, i32
  }
  func.func @transform_3(%arg0: i32, %arg1: i32) -> (i32, i32) {
    %c0_i32 = arith.constant 0 : i32
    %c0_i32_0 = arith.constant 0 : i32
    %c0_i32_1 = arith.constant 0 : i32
    return %c0_i32, %c0_i32_0 : i32, i32
  }
  func.func @transform_4(%arg0: i32, %arg1: i32) -> (i32, i32, i32) {
    %c0_i32 = arith.constant 0 : i32
    %c0_i32_0 = arith.constant 0 : i32
    %c0_i32_1 = arith.constant 0 : i32
    %c0_i32_2 = arith.constant 0 : i32
    return %c0_i32, %c0_i32_0, %c0_i32_1 : i32, i32, i32
  }
  func.func @transform_5(%arg0: i32, %arg1: i32) -> (i32, i32) {
    %c0_i32 = arith.constant 0 : i32
    %c0_i32_0 = arith.constant 0 : i32
    %c0_i32_1 = arith.constant 0 : i32
    return %c0_i32, %c0_i32_0 : i32, i32
  }
  func.func @transform_6(%arg0: i32, %arg1: i32) -> (i32, i32, i32, i32) {
    %c0_i32 = arith.constant 0 : i32
    %c0_i32_0 = arith.constant 0 : i32
    %c0_i32_1 = arith.constant 0 : i32
    return %arg0, %arg1, %c0_i32, %c0_i32_0 : i32, i32, i32, i32
  }
}

</mosaic_0001>

<llo_original>
// kernel: tpu_custom_call.1
$region0: #{tpu_custom_call.1}
  #allocation0 [shape = 'u32[]', space=smem, size = 0x4, offset = 0x4, fixed_abs, tag = 'smem constant byte address 0x4 - core index']
  #allocation1 [shape = 'u32[144,128]{1,0:T(1,128)}', space=vmem, size = 0x12000, scoped, tag = 'internal scratch']
  #allocation2 [shape = 'f32[4,640]{1,0:T(4,128)}', space=vmem, size = 0x2800, scoped, tag = 'scratch operand']
  %s0 = inlined_call_operand.hbm [shape: f32[3,1,478], index: 0, kind: input, shape index: {}]
  %s1 = inlined_call_operand.hbm [shape: f32[2,3,4,700], index: 1, kind: input, shape index: {}]
  %s2 = inlined_call_operand.vmem [shape: f32[3,4,36], index: 2, kind: input, shape index: {}]
  %s3 = inlined_call_operand.vmem [shape: f32[4,1], index: 3, kind: input, shape index: {}]
  %s4 = inlined_call_operand.vmem [shape: f32[3,4,36], index: 4, kind: input, shape index: {}]
  %s5 = inlined_call_operand.vmem [shape: f32[4,1], index: 5, kind: input, shape index: {}]
  %s6 = inlined_call_operand.hbm [shape: f32[2,3,4,300], index: 6, kind: output, shape index: {}]
  %s7 = sld [smem:[#allocation0]]
  $region65: #{tpu_custom_call.1} parent=0
    _
  %s9 = ssub.s32 1, %s7
  %s10 = scalar_select 0, %s9, %s7
  $region1: #{tpu_custom_call.1} parent=0
    #allocation3 [shape = 'u8[4096]{0}', space=vmem, size = 0x1000, scoped, tag = 'input window, operand 0']
    #allocation4 [shape = 's32[2]{0}', space=sflag, size = 0x8, scoped, tag = 'scoped memory for tpu_custom_call.1']
    #allocation5 [shape = 's32[2]{0}', space=sflag, size = 0x8, scoped, tag = 'scoped memory for tpu_custom_call.1']
    #allocation6 [shape = 'u8[24576]{0}', space=vmem, size = 0x6000, scoped, tag = 'input window, operand 1']
    #allocation7 [shape = 's32[2]{0}', space=sflag, size = 0x8, scoped, tag = 'scoped memory for tpu_custom_call.1']
    #allocation8 [shape = 'u8[12288]{0}', space=vmem, size = 0x3000, scoped, tag = 'output window, operand 0']
    %11 = vsyncpa [#allocation4], 0
    %s12 = scalar_lea.sflag [#allocation4], 1
    %13 = vsyncpa %s12, 0
    %14 = vsyncpa [#allocation7], 0
    %s15 = scalar_lea.sflag [#allocation7], 1
    %16 = vsyncpa %s15, 0
    %17 = vsyncpa [#allocation5], 0
    %s18 = scalar_lea.sflag [#allocation5], 1
    %19 = vsyncpa %s18, 0
    loop: start=0, step=1, limit=8
    $region2: #{tpu_custom_call.1} parent=1 // loop_pre_header
      _
    $region3: #{tpu_custom_call.1} parent=1 // loop_header
      %s21 = sphi 0, %s25
      %p22 = scmp.ge.s32.totalorder %s21, 8
      %s28 = sphi 0, %s40
      %s29 = sphi 0, %s36
      %s30 = sphi 0, %s28
      %s31 = sphi 0, %s29
      %s32 = sphi 0, %s30
      %s33 = sphi 0, %s31
      %s43 = sphi 0, %s45
      %s46 = sphi 0, %s43
      %s47 = sphi 0, %s46
      %s63 = sphi 0, %s47
      %s71 = sphi 0, %s73
      %s74 = sphi 0, %s71
      %s75 = sphi 0, %s74
      %s91 = sphi 0, %s75
      %s95 = sphi 0, %s95
      %s97 = sphi 0, %s95
      %s98 = sphi 0, %s97
      %s112 = sphi 0, %s98
      %s116 = sphi 0, %s116
      %s118 = sphi 0, %s116
      %s119 = sphi 0, %s118
      %s133 = sphi 0, %s119
      %s137 = sphi 0, %s137
      %s139 = sphi 0, %s137
      %s140 = sphi 0, %s139
      %s154 = sphi 0, %s140
      %s158 = sphi 0, %s158
      %s160 = sphi 0, %s158
      %s161 = sphi 0, %s160
      %s175 = sphi 0, %s161
      %s183 = sphi 0, %s185
      %s186 = sphi 0, %s183
      %s187 = sphi 0, %s186
      %s203 = sphi 0, %s187
    $region4: #{tpu_custom_call.1} parent=1 // loop_header_branch
      %24 = sbr.rel (%p22) target = $region8
    $region5: #{tpu_custom_call.1} parent=1 // loop_body
      %s26 = ssub.s32 %s21, 1
      %s27 = ssub.s32 %s21, 2
      %s34 = sadd.s32 1, %s29
      %p35 = scmp.ge.s32.totalorder %s34, 3
      %s36 = scalar_select %p35, 0, %s34
      %s37 = sadd.s32 1, %s28
      %s38 = scalar_select %p35, %s37, %s28
      %p39 = scmp.ge.s32.totalorder %s38, 2
      %s40 = scalar_select %p39, 0, %s38
      %s41 = ssub.s32 %s29, %s36
      %p42 = scmp.eq.s32.totalorder %s41, 0
      %s44 = sadd.s32 %s43, 1
      %s45 = scalar_select %p42, %s43, %s44
      %p48 = pneg %p42
      %p49 = scmp.eq.s32.totalorder %s21, 5
      %p50 = por %p48, %p49
      %p51 = scmp.ne.s32.totalorder %s43, %s46
      %p52 = scmp.eq.s32.totalorder %s21, 0
      %p53 = por %p51, %p52
      %p54 = scmp.ne.s32.totalorder %s43, %s46
      %p55 = scmp.eq.s32.totalorder %s26, 5
      %p56 = por %p54, %p55
      %p57 = scmp.ne.s32.totalorder %s46, %s47
      %p58 = scmp.eq.s32.totalorder %s26, 0
      %p59 = por %p57, %p58
      %p60 = scmp.ne.s32.totalorder %s46, %s47
      %p61 = scmp.eq.s32.totalorder %s27, 5
      %p62 = por %p60, %p61
      %p64 = scmp.ne.s32.totalorder %s47, %s63
      %p65 = scmp.eq.s32.totalorder %s27, 0
      %p66 = por %p64, %p65
      %s67 = ssub.s32 %s28, %s40
      %s68 = ssub.s32 %s29, %s36
      %s69 = sor.u32 %s67, %s68
      %p70 = scmp.eq.s32.totalorder %s69, 0
      %s72 = sadd.s32 %s71, 1
      %s73 = scalar_select %p70, %s71, %s72
      %p76 = pneg %p70
      %p77 = scmp.eq.s32.totalorder %s21, 5
      %p78 = por %p76, %p77
      %p79 = scmp.ne.s32.totalorder %s71, %s74
      %p80 = scmp.eq.s32.totalorder %s21, 0
      %p81 = por %p79, %p80
      %p82 = scmp.ne.s32.totalorder %s71, %s74
      %p83 = scmp.eq.s32.totalorder %s26, 5
      %p84 = por %p82, %p83
      %p85 = scmp.ne.s32.totalorder %s74, %s75
      %p86 = scmp.eq.s32.totalorder %s26, 0
      %p87 = por %p85, %p86
      %p88 = scmp.ne.s32.totalorder %s74, %s75
      %p89 = scmp.eq.s32.totalorder %s27, 5
      %p90 = por %p88, %p89
      %p92 = scmp.ne.s32.totalorder %s75, %s91
      %p93 = scmp.eq.s32.totalorder %s27, 0
      %p94 = por %p92, %p93
      %s96 = sadd.s32 %s95, 1
      %p99 = scmp.eq.s32.totalorder %s21, 5
      %p100 = scmp.ne.s32.totalorder %s95, %s97
      %p101 = scmp.eq.s32.totalorder %s21, 0
      %p102 = por %p100, %p101
      %p103 = scmp.ne.s32.totalorder %s95, %s97
      %p104 = scmp.eq.s32.totalorder %s26, 5
      %p105 = por %p103, %p104
      %p106 = scmp.ne.s32.totalorder %s97, %s98
      %p107 = scmp.eq.s32.totalorder %s26, 0
      %p108 = por %p106, %p107
      %p109 = scmp.ne.s32.totalorder %s97, %s98
      %p110 = scmp.eq.s32.totalorder %s27, 5
      %p111 = por %p109, %p110
      %p113 = scmp.ne.s32.totalorder %s98, %s112
      %p114 = scmp.eq.s32.totalorder %s27, 0
      %p115 = por %p113, %p114
      %s117 = sadd.s32 %s116, 1
      %p120 = scmp.eq.s32.totalorder %s21, 5
      %p121 = scmp.ne.s32.totalorder %s116, %s118
      %p122 = scmp.eq.s32.totalorder %s21, 0
      %p123 = por %p121, %p122
      %p124 = scmp.ne.s32.totalorder %s116, %s118
      %p125 = scmp.eq.s32.totalorder %s26, 5
      %p126 = por %p124, %p125
      %p127 = scmp.ne.s32.totalorder %s118, %s119
      %p128 = scmp.eq.s32.totalorder %s26, 0
      %p129 = por %p127, %p128
      %p130 = scmp.ne.s32.totalorder %s118, %s119
      %p131 = scmp.eq.s32.totalorder %s27, 5
      %p132 = por %p130, %p131
      %p134 = scmp.ne.s32.totalorder %s119, %s133
      %p135 = scmp.eq.s32.totalorder %s27, 0
      %p136 = por %p134, %p135
      %s138 = sadd.s32 %s137, 1
      %p141 = scmp.eq.s32.totalorder %s21, 5
      %p142 = scmp.ne.s32.totalorder %s137, %s139
      %p143 = scmp.eq.s32.totalorder %s21, 0
      %p144 = por %p142, %p143
      %p145 = scmp.ne.s32.totalorder %s137, %s139
      %p146 = scmp.eq.s32.totalorder %s26, 5
      %p147 = por %p145, %p146
      %p148 = scmp.ne.s32.totalorder %s139, %s140
      %p149 = scmp.eq.s32.totalorder %s26, 0
      %p150 = por %p148, %p149
      %p151 = scmp.ne.s32.totalorder %s139, %s140
      %p152 = scmp.eq.s32.totalorder %s27, 5
      %p153 = por %p151, %p152
      %p155 = scmp.ne.s32.totalorder %s140, %s154
      %p156 = scmp.eq.s32.totalorder %s27, 0
      %p157 = por %p155, %p156
      %s159 = sadd.s32 %s158, 1
      %p162 = scmp.eq.s32.totalorder %s21, 5
      %p163 = scmp.ne.s32.totalorder %s158, %s160
      %p164 = scmp.eq.s32.totalorder %s21, 0
      %p165 = por %p163, %p164
      %p166 = scmp.ne.s32.totalorder %s158, %s160
      %p167 = scmp.eq.s32.totalorder %s26, 5
      %p168 = por %p166, %p167
      %p169 = scmp.ne.s32.totalorder %s160, %s161
      %p170 = scmp.eq.s32.totalorder %s26, 0
      %p171 = por %p169, %p170
      %p172 = scmp.ne.s32.totalorder %s160, %s161
      %p173 = scmp.eq.s32.totalorder %s27, 5
      %p174 = por %p172, %p173
      %p176 = scmp.ne.s32.totalorder %s161, %s175
      %p177 = scmp.eq.s32.totalorder %s27, 0
      %p178 = por %p176, %p177
      %s179 = ssub.s32 %s28, %s40
      %s180 = ssub.s32 %s29, %s36
      %s181 = sor.u32 %s179, %s180
      %p182 = scmp.eq.s32.totalorder %s181, 0
      %s184 = sadd.s32 %s183, 1
      %s185 = scalar_select %p182, %s183, %s184
      %p188 = pneg %p182
      %p189 = scmp.eq.s32.totalorder %s21, 5
      %p190 = por %p188, %p189
      %p191 = scmp.ne.s32.totalorder %s183, %s186
      %p192 = scmp.eq.s32.totalorder %s21, 0
      %p193 = por %p191, %p192
      %p194 = scmp.ne.s32.totalorder %s183, %s186
      %p195 = scmp.eq.s32.totalorder %s26, 5
      %p196 = por %p194, %p195
      %p197 = scmp.ne.s32.totalorder %s186, %s187
      %p198 = scmp.eq.s32.totalorder %s26, 0
      %p199 = por %p197, %p198
      %p200 = scmp.ne.s32.totalorder %s186, %s187
      %p201 = scmp.eq.s32.totalorder %s27, 5
      %p202 = por %p200, %p201
      %p204 = scmp.ne.s32.totalorder %s187, %s203
      %p205 = scmp.eq.s32.totalorder %s27, 0
      %p206 = por %p204, %p205
      %p207 = scmp.le.s32.totalorder 1, %s21
      %p208 = scmp.lt.s32.totalorder %s21, 7
      %p209 = pnand %p207, %p208
      %p210 = pneg %p209
      // Predicated region
      $region9: #{tpu_custom_call.1} parent=5 // pred_check
        _
      $region10: #{tpu_custom_call.1} parent=5 // pred_check_branch
        %212 = sbr.rel (%p209) target = $region12
      $region11: #{tpu_custom_call.1} parent=5 // pred_region
        %s213 = ssub.s32 %s21, 1
        // Predicated region
        $region13: #{tpu_custom_call.1} parent=11 // pred_check
          %p214 = pneg %p108
        $region14: #{tpu_custom_call.1} parent=11 // pred_check_branch
          %216 = sbr.rel (%p214) target = $region16
        $region15: #{tpu_custom_call.1} parent=11 // pred_region
          _
        $region16: #{tpu_custom_call.1} parent=11 // pred_fallthru
          _
        // Predicated region
        $region17: #{tpu_custom_call.1} parent=11 // pred_check
          %p217 = pneg %p129
        $region18: #{tpu_custom_call.1} parent=11 // pred_check_branch
          %219 = sbr.rel (%p217) target = $region20
        $region19: #{tpu_custom_call.1} parent=11 // pred_region
          _
        $region20: #{tpu_custom_call.1} parent=11 // pred_fallthru
          _
        // Predicated region
        $region21: #{tpu_custom_call.1} parent=11 // pred_check
          %p220 = pneg %p150
        $region22: #{tpu_custom_call.1} parent=11 // pred_check_branch
          %222 = sbr.rel (%p220) target = $region24
        $region23: #{tpu_custom_call.1} parent=11 // pred_region
          _
        $region24: #{tpu_custom_call.1} parent=11 // pred_fallthru
          _
        // Predicated region
        $region25: #{tpu_custom_call.1} parent=11 // pred_check
          %p223 = pneg %p171
        $region26: #{tpu_custom_call.1} parent=11 // pred_check_branch
          %225 = sbr.rel (%p223) target = $region28
        $region27: #{tpu_custom_call.1} parent=11 // pred_region
          _
        $region28: #{tpu_custom_call.1} parent=11 // pred_fallthru
          _
      $region12: #{tpu_custom_call.1} parent=5 // pred_fallthru
        _
      %p226 = scmp.lt.s32.totalorder %s21, 6
      // Predicated region
      $region29: #{tpu_custom_call.1} parent=5 // pred_check
        %p227 = pneg %p226
      $region30: #{tpu_custom_call.1} parent=5 // pred_check_branch
        %229 = sbr.rel (%p227) target = $region32
      $region31: #{tpu_custom_call.1} parent=5 // pred_region
        // Predicated region
        $region33: #{tpu_custom_call.1} parent=31 // pred_check
          %p230 = pneg %p53
        $region34: #{tpu_custom_call.1} parent=31 // pred_check_branch
          %232 = sbr.rel (%p230) target = $region36
        $region35: #{tpu_custom_call.1} parent=31 // pred_region
          %s233 = sand.u32 %s43, 1
          %s234 = scalar_lea.sflag [#allocation4], %s233
          %s235 = sand.u32 %s43, 1
          %s236 = smul.addr %s235, 4
          %s237 = scalar_lea.vmem [#allocation3], %s236
          %s239 = ssub.s32 64, 64
          %240 = vsyncadd %s234, %s239
          %s241 = smul.addr %s29, 4
          %s242 = smul.addr %s241, 16
          %s243 = scalar_lea.hbm %s0, %s242
          %s245 = sshll.u32 %s237, 4
          %s246 = int_to_ptr.vmem [resolvable:$true] %s245
          %248 = dma.hbm_to_vmem [thread:$0]  %s243, 64, %s246, %s234
        $region36: #{tpu_custom_call.1} parent=31 // pred_fallthru
          _
        // Predicated region
        $region37: #{tpu_custom_call.1} parent=31 // pred_check
          %p249 = pneg %p81
        $region38: #{tpu_custom_call.1} parent=31 // pred_check_branch
          %251 = sbr.rel (%p249) target = $region40
        $region39: #{tpu_custom_call.1} parent=31 // pred_region
          %s252 = sand.u32 %s71, 1
          %s253 = scalar_lea.sflag [#allocation7], %s252
          %s254 = sand.u32 %s71, 1
          %s255 = smul.addr %s254, 24
          %s256 = scalar_lea.vmem [#allocation6], %s255
          %s258 = ssub.s32 384, 384
          %259 = vsyncadd %s253, %s258
          %s260 = smul.addr %s29, 6
          %s261 = smul.addr %s28, 18
          %s262 = sadd.s32 %s260, %s261
          %s263 = smul.addr %s262, 64
          %s264 = scalar_lea.hbm %s1, %s263
          %s266 = sshll.u32 %s256, 4
          %s267 = int_to_ptr.vmem [resolvable:$true] %s266
          %269 = dma.hbm_to_vmem [thread:$0]  %s264, 384, %s267, %s253
        $region40: #{tpu_custom_call.1} parent=31 // pred_fallthru
          _
      $region32: #{tpu_custom_call.1} parent=5 // pred_fallthru
        _
      %p270 = scmp.le.s32.totalorder 1, %s21
      %p271 = scmp.lt.s32.totalorder %s21, 7
      %p272 = pnand %p270, %p271
      %p273 = pneg %p272
      // Predicated region
      $region41: #{tpu_custom_call.1} parent=5 // pred_check
        _
      $region42: #{tpu_custom_call.1} parent=5 // pred_check_branch
        %275 = sbr.rel (%p272) target = $region44
      $region43: #{tpu_custom_call.1} parent=5 // pred_region
        %s276 = ssub.s32 %s21, 1
        %s277 = sand.u32 %s46, 1
        %s278 = scalar_lea.sflag [#allocation4], %s277
        %s279 = sand.u32 %s46, 1
        %s280 = smul.addr %s279, 4
        %s281 = scalar_lea.vmem [#allocation3], %s280
        // Predicated region
        $region45: #{tpu_custom_call.1} parent=43 // pred_check
          %p282 = pneg %p59
        $region46: #{tpu_custom_call.1} parent=43 // pred_check_branch
          %284 = sbr.rel (%p282) target = $region48
        $region47: #{tpu_custom_call.1} parent=43 // pred_region
          %285 = dma.done %s278, 64
        $region48: #{tpu_custom_call.1} parent=43 // pred_fallthru
          _
        %s286 = sand.u32 %s74, 1
        %s287 = scalar_lea.sflag [#allocation7], %s286
        %s288 = sand.u32 %s74, 1
        %s289 = smul.addr %s288, 24
        %s290 = scalar_lea.vmem [#allocation6], %s289
        // Predicated region
        $region49: #{tpu_custom_call.1} parent=43 // pred_check
          %p291 = pneg %p87
        $region50: #{tpu_custom_call.1} parent=43 // pred_check_branch
          %293 = sbr.rel (%p291) target = $region52
        $region51: #{tpu_custom_call.1} parent=43 // pred_region
          %294 = dma.done %s287, 384
        $region52: #{tpu_custom_call.1} parent=43 // pred_fallthru
          _
        %s295 = sand.u32 %s46, 1
        %s296 = scalar_lea.sflag [#allocation4], %s295
        %s297 = sand.u32 %s46, 1
        %s298 = smul.addr %s297, 4
        %s299 = scalar_lea.vmem [#allocation3], %s298
        %p300 = pneg %p59
        %p301 = pneg %p56
        %s302 = sand.u32 %s74, 1
        %s303 = scalar_lea.sflag [#allocation7], %s302
        %s304 = sand.u32 %s74, 1
        %s305 = smul.addr %s304, 24
        %s306 = scalar_lea.vmem [#allocation6], %s305
        %p307 = pneg %p87
        %p308 = pneg %p84
        %p309 = pneg %p108
        %p310 = pneg %p105
        %p311 = pneg %p129
        %p312 = pneg %p126
        %p313 = pneg %p150
        %p314 = pneg %p147
        %p315 = pneg %p171
        %p316 = pneg %p168
        %p317 = pneg %p199
        %p318 = pneg %p196
        %s319 = sand.u32 %s186, 1
        %s320 = scalar_lea.sflag [#allocation5], %s319
        %s321 = sand.u32 %s186, 1
        %s322 = smul.addr %s321, 12
        %s323 = scalar_lea.vmem [#allocation8], %s322
        %v324 = vld [vmem:[%s290] sm:$0xff]
        %v325 = vld [vmem:[%s290 + $0x8] sm:$0xff]
        %v328 = vcombine.high %v324, %v324
        %v329 = vcombine.high %v325, %v325
        %v332 = vcombine.low %v324, %v324
        %v333 = vcombine.low %v325, %v325
        %334 = vrot.lane.b32.xlu0 %v332, 127
        %v335 = vpop.permute.xlu0 %334
        %336 = vrot.lane.b32.xlu0 %v324, 127
        %v337 = vpop.permute.xlu0 %336
        %338 = vrot.lane.b32.xlu0 %v333, 127
        %v339 = vpop.permute.xlu0 %338
        %340 = vrot.lane.b32.xlu0 %v325, 127
        %v341 = vpop.permute.xlu0 %340
        %vm342 = vcmask 1039360
        %v343 = vsel %vm342, %v335, %v337
        %v344 = vsel %vm342, %v337, %v339
        %v345 = vsel %vm342, %v339, %v341
        %350 = vrot.lane.b32.xlu0 %v324, 126
        %v351 = vpop.permute.xlu0 %350
        %352 = vrot.lane.b32.xlu0 %v328, 126
        %v353 = vpop.permute.xlu0 %352
        %354 = vrot.lane.b32.xlu0 %v325, 126
        %v355 = vpop.permute.xlu0 %354
        %356 = vrot.lane.b32.xlu0 %v329, 126
        %v357 = vpop.permute.xlu0 %356
        %vm358 = vcmask 1031168
        %v359 = vsel %vm358, %v351, %v353
        %v360 = vsel %vm358, %v353, %v355
        %v361 = vsel %vm358, %v355, %v357
        %366 = vrot.lane.b32.xlu0 %v332, 118
        %v367 = vpop.permute.xlu0 %366
        %368 = vrot.lane.b32.xlu0 %v324, 118
        %v369 = vpop.permute.xlu0 %368
        %370 = vrot.lane.b32.xlu0 %v333, 118
        %v371 = vpop.permute.xlu0 %370
        %372 = vrot.lane.b32.xlu0 %v325, 118
        %v373 = vpop.permute.xlu0 %372
        %vm374 = vcmask 965632
        %v375 = vsel %vm374, %v367, %v369
        %v376 = vsel %vm374, %v369, %v371
        %v377 = vsel %vm374, %v371, %v373
        %382 = vrot.lane.b32.xlu0 %v324, 117
        %v383 = vpop.permute.xlu0 %382
        %384 = vrot.lane.b32.xlu0 %v328, 117
        %v385 = vpop.permute.xlu0 %384
        %386 = vrot.lane.b32.xlu0 %v325, 117
        %v387 = vpop.permute.xlu0 %386
        %388 = vrot.lane.b32.xlu0 %v329, 117
        %v389 = vpop.permute.xlu0 %388
        %vm390 = vcmask 957440
        %v391 = vsel %vm390, %v383, %v385
        %v392 = vsel %vm390, %v385, %v387
        %v393 = vsel %vm390, %v387, %v389
        %398 = vrot.lane.b32.xlu0 %v332, 116
        %v399 = vpop.permute.xlu0 %398
        %400 = vrot.lane.b32.xlu0 %v324, 116
        %v401 = vpop.permute.xlu0 %400
        %402 = vrot.lane.b32.xlu0 %v333, 116
        %v403 = vpop.permute.xlu0 %402
        %404 = vrot.lane.b32.xlu0 %v325, 116
        %v405 = vpop.permute.xlu0 %404
        %vm406 = vcmask 949248
        %v407 = vsel %vm406, %v399, %v401
        %v408 = vsel %vm406, %v401, %v403
        %v409 = vsel %vm406, %v403, %v405
        %414 = vrot.lane.b32.xlu0 %v324, 108
        %v415 = vpop.permute.xlu0 %414
        %416 = vrot.lane.b32.xlu0 %v328, 108
        %v417 = vpop.permute.xlu0 %416
        %418 = vrot.lane.b32.xlu0 %v325, 108
        %v419 = vpop.permute.xlu0 %418
        %420 = vrot.lane.b32.xlu0 %v329, 108
        %v421 = vpop.permute.xlu0 %420
        %vm422 = vcmask 883712
        %v423 = vsel %vm422, %v415, %v417
        %v424 = vsel %vm422, %v417, %v419
        %v425 = vsel %vm422, %v419, %v421
        %430 = vrot.lane.b32.xlu0 %v332, 107
        %v431 = vpop.permute.xlu0 %430
        %432 = vrot.lane.b32.xlu0 %v324, 107
        %v433 = vpop.permute.xlu0 %432
        %434 = vrot.lane.b32.xlu0 %v333, 107
        %v435 = vpop.permute.xlu0 %434
        %436 = vrot.lane.b32.xlu0 %v325, 107
        %v437 = vpop.permute.xlu0 %436
        %vm438 = vcmask 875520
        %v439 = vsel %vm438, %v431, %v433
        %v440 = vsel %vm438, %v433, %v435
        %v441 = vsel %vm438, %v435, %v437
        %446 = vrot.lane.b32.xlu0 %v324, 106
        %v447 = vpop.permute.xlu0 %446
        %448 = vrot.lane.b32.xlu0 %v328, 106
        %v449 = vpop.permute.xlu0 %448
        %450 = vrot.lane.b32.xlu0 %v325, 106
        %v451 = vpop.permute.xlu0 %450
        %452 = vrot.lane.b32.xlu0 %v329, 106
        %v453 = vpop.permute.xlu0 %452
        %vm454 = vcmask 867328
        %v455 = vsel %vm454, %v447, %v449
        %v456 = vsel %vm454, %v449, %v451
        %v457 = vsel %vm454, %v451, %v453
        %vm458 = vcmask 1043456
        %v459 = vsel %vm458, %v324, %v343
        %v460 = vsel %vm458, %v328, %v344
        %v461 = vsel %vm458, %v325, %v345
        %v462 = vsel %vm458, %v329, %v341
        %v463 = vsel %vm458, %v359, %v375
        %v464 = vsel %vm458, %v360, %v376
        %v465 = vsel %vm458, %v361, %v377
        %v466 = vsel %vm458, %v357, %v373
        %v467 = vsel %vm458, %v391, %v407
        %v468 = vsel %vm458, %v392, %v408
        %v469 = vsel %vm458, %v393, %v409
        %v470 = vsel %vm458, %v389, %v405
        %v471 = vsel %vm458, %v423, %v439
        %v472 = vsel %vm458, %v424, %v440
        %v473 = vsel %vm458, %v425, %v441
        %v474 = vsel %vm458, %v421, %v437
        %v475 = vld [vmem:[%s2] sm:$0xf]
        %v476 = vld [vmem:[%s290 + $0x10] sm:$0xf]
        %v478 = vcombine.low %v476, %v476
        %479 = vrot.lane.b32.xlu0 %v478, 127
        %v480 = vpop.permute.xlu0 %479
        %v481 = vsel %vm342, %v341, %v480
        %484 = vrot.lane.b32.xlu0 %v476, 126
        %v485 = vpop.permute.xlu0 %484
        %v486 = vsel %vm358, %v357, %v485
        %489 = vrot.lane.b32.xlu0 %v478, 118
        %v490 = vpop.permute.xlu0 %489
        %v491 = vsel %vm374, %v373, %v490
        %494 = vrot.lane.b32.xlu0 %v476, 117
        %v495 = vpop.permute.xlu0 %494
        %v496 = vsel %vm390, %v389, %v495
        %499 = vrot.lane.b32.xlu0 %v478, 116
        %v500 = vpop.permute.xlu0 %499
        %v501 = vsel %vm406, %v405, %v500
        %504 = vrot.lane.b32.xlu0 %v476, 108
        %v505 = vpop.permute.xlu0 %504
        %v506 = vsel %vm422, %v421, %v505
        %509 = vrot.lane.b32.xlu0 %v478, 107
        %v510 = vpop.permute.xlu0 %509
        %v511 = vsel %vm438, %v437, %v510
        %514 = vrot.lane.b32.xlu0 %v476, 106
        %v515 = vpop.permute.xlu0 %514
        %v516 = vsel %vm454, %v453, %v515
        %v517 = vsel %vm458, %v329, %v481
        %v518 = vsel %vm458, %v476, %v480
        %v519 = vsel %vm458, %v486, %v491
        %v520 = vsel %vm458, %v485, %v490
        %v521 = vsel %vm458, %v496, %v501
        %v522 = vsel %vm458, %v495, %v500
        %v523 = vsel %vm458, %v506, %v511
        %v524 = vsel %vm458, %v505, %v510
        %s525 = scalar_lea.vmem %s2, 4
        %v526 = vld [vmem:[%s525] sm:$0xf]
        %547 = vrot.lane.b32.xlu0 %v459, 28
        %v548 = vpop.permute.xlu0 %547
        %549 = vrot.lane.b32.xlu0 %v460, 28
        %v550 = vpop.permute.xlu0 %549
        %551 = vrot.lane.b32.xlu0 %v461, 28
        %v552 = vpop.permute.xlu0 %551
        %553 = vrot.lane.b32.xlu0 %v517, 28
        %v554 = vpop.permute.xlu0 %553
        %555 = vrot.lane.b32.xlu0 %v518, 28
        %v556 = vpop.permute.xlu0 %555
        %557 = vrot.lane.b32.xlu0 %v463, 28
        %v558 = vpop.permute.xlu0 %557
        %559 = vrot.lane.b32.xlu0 %v464, 28
        %v560 = vpop.permute.xlu0 %559
        %561 = vrot.lane.b32.xlu0 %v465, 28
        %v562 = vpop.permute.xlu0 %561
        %563 = vrot.lane.b32.xlu0 %v519, 28
        %v564 = vpop.permute.xlu0 %563
        %565 = vrot.lane.b32.xlu0 %v520, 28
        %v566 = vpop.permute.xlu0 %565
        %567 = vrot.lane.b32.xlu0 %v467, 28
        %v568 = vpop.permute.xlu0 %567
        %569 = vrot.lane.b32.xlu0 %v468, 28
        %v570 = vpop.permute.xlu0 %569
        %571 = vrot.lane.b32.xlu0 %v469, 28
        %v572 = vpop.permute.xlu0 %571
        %573 = vrot.lane.b32.xlu0 %v521, 28
        %v574 = vpop.permute.xlu0 %573
        %575 = vrot.lane.b32.xlu0 %v522, 28
        %v576 = vpop.permute.xlu0 %575
        %577 = vrot.lane.b32.xlu0 %v471, 28
        %v578 = vpop.permute.xlu0 %577
        %579 = vrot.lane.b32.xlu0 %v472, 28
        %v580 = vpop.permute.xlu0 %579
        %581 = vrot.lane.b32.xlu0 %v473, 28
        %v582 = vpop.permute.xlu0 %581
        %583 = vrot.lane.b32.xlu0 %v523, 28
        %v584 = vpop.permute.xlu0 %583
        %585 = vrot.lane.b32.xlu0 %v524, 28
        %v586 = vpop.permute.xlu0 %585
        %587 = vrot.lane.b32.xlu0 %v455, 28
        %v588 = vpop.permute.xlu0 %587
        %589 = vrot.lane.b32.xlu0 %v456, 28
        %v590 = vpop.permute.xlu0 %589
        %591 = vrot.lane.b32.xlu0 %v457, 28
        %v592 = vpop.permute.xlu0 %591
        %593 = vrot.lane.b32.xlu0 %v516, 28
        %v594 = vpop.permute.xlu0 %593
        %595 = vrot.lane.b32.xlu0 %v515, 28
        %v596 = vpop.permute.xlu0 %595
        %vm597 = vcmask 228352
        %v598 = vsel %vm597, %v548, %v550
        %v599 = vsel %vm597, %v550, %v552
        %v600 = vsel %vm597, %v552, %v554
        %v601 = vsel %vm597, %v554, %v556
        %v602 = vsel %vm597, %v558, %v560
        %v603 = vsel %vm597, %v560, %v562
        %v604 = vsel %vm597, %v562, %v564
        %v605 = vsel %vm597, %v564, %v566
        %v606 = vsel %vm597, %v568, %v570
        %v607 = vsel %vm597, %v570, %v572
        %v608 = vsel %vm597, %v572, %v574
        %v609 = vsel %vm597, %v574, %v576
        %v610 = vsel %vm597, %v578, %v580
        %v611 = vsel %vm597, %v580, %v582
        %v612 = vsel %vm597, %v582, %v584
        %v613 = vsel %vm597, %v584, %v586
        %v614 = vsel %vm597, %v588, %v590
        %v615 = vsel %vm597, %v590, %v592
        %v616 = vsel %vm597, %v592, %v594
        %v617 = vsel %vm597, %v594, %v596
        %vm634 = vcmask 293888
        %v636 = vsel %vm634, %v526, 0
        %v638 = vsel %vm458, %v614, 0
        %v640 = vsel %vm458, %v615, 0
        %v642 = vsel %vm458, %v616, 0
        %v644 = vsel %vm458, %v617, 0
        %646 = vmatprep.subr.mxu0 %v599
        %647 = vmatpush1.msra.mxu0 %v598
        %648 = vmatprep.subr.mxu0 %v603
        %649 = vmatpush1.msra.mxu0 %v602
        %650 = vmatprep.subr.mxu0 %v607
        %651 = vmatpush1.msra.mxu0 %v606
        %652 = vmatprep.subr.mxu0 %v611
        %653 = vmatpush1.msra.mxu0 %v610
        %654 = vmatprep.subr.mxu0 %v640
        %655 = vmatpush1.msra.mxu0 %v638
        %656 = vmatprep.subr.mxu0 0.0
        %657 = vmatpush1.msra.mxu0 0.0
        %658 = vmatprep.subr.mxu0 0.0
        %659 = vmatpush1.msra.mxu0 0.0
        %660 = vmatprep.subr.mxu0 0.0
        %661 = vmatpush1.msra.mxu0 0.0
        %662 = vmatprep.subr.mxu0 0.0
        %663 = vmatpush1.msra.mxu0 0.0
        %664 = vmatprep.subr.mxu0 0.0
        %665 = vmatpush1.msra.mxu0 0.0
        %666 = vmatprep.subr.mxu0 0.0
        %667 = vmatpush1.msra.mxu0 0.0
        %668 = vmatprep.subr.mxu0 0.0
        %669 = vmatpush1.msra.mxu0 0.0
        %670 = vmatprep.subr.mxu0 0.0
        %671 = vmatpush1.msra.mxu0 0.0
        %672 = vmatprep.subr.mxu0 0.0
        %673 = vmatpush1.msra.mxu0 0.0
        %674 = vmatprep.subr.mxu0 0.0
        %675 = vmatpush1.msra.mxu0 0.0
        %676 = vmatprep.subr.mxu0 0.0
        %677 = vmatpush1.msra.mxu0 0.0
        %678 = vmatprep.subr.mxu0 0.0
        %679 = vmatpush1.msra.mxu0 0.0
        %680 = vmatprep.subr.mxu0 0.0
        %681 = vmatpush1.msra.mxu0 0.0
        %682 = vmatprep.subr.mxu0 0.0
        %683 = vmatpush1.msra.mxu0 0.0
        %684 = vmatprep.subr.mxu0 0.0
        %685 = vmatpush1.msra.mxu0 0.0
        %686 = vmatprep.subr.mxu0 0.0
        %687 = vmatpush1.msra.mxu0 0.0
        %688 = vmatprep.subr.mxu0 0.0
        %689 = vmatpush1.msra.mxu0 0.0
        %690 = vmatprep.subr.mxu0 0.0
        %691 = vmatpush1.msra.mxu0 0.0
        %692 = vmatprep.subr.mxu0 0.0
        %693 = vmatpush1.msra.mxu0 0.0
        %694 = vmatprep.subr.mxu0 0.0
        %695 = vmatpush1.msra.mxu0 0.0
        %696 = vmatprep.subr.mxu0 0.0
        %697 = vmatpush1.msra.mxu0 0.0
        %698 = vmatprep.subr.mxu0 0.0
        %699 = vmatpush1.msra.mxu0 0.0
        %700 = vmatprep.subr.mxu0 0.0
        %701 = vmatpush1.msra.mxu0 0.0
        %702 = vmatprep.subr.mxu0 0.0
        %703 = vmatpush1.msra.mxu0 0.0
        %704 = vmatprep.subr.mxu0 0.0
        %705 = vmatpush1.msra.mxu0 0.0
        %706 = vmatprep.subr.mxu0 0.0
        %707 = vmatpush1.msra.mxu0 0.0
        %708 = vmatprep.subr.mxu0 0.0
        %709 = vmatpush1.msra.mxu0 0.0
        %710 = vmatprep.mubr.f32.mxu0 0.0
        %711 = vmatmul.mubr.f32.gmra.mrb[0].mxu0 %v636
        %v712 = vpop.f32.mrb[0].mxu0
        %v713 = vadd.f32 0.0, %v712
        %v714 = vpop.f32.mrb[0].mxu0
        %v715 = vadd.f32 0.0, %v714
        %716 = vdwg.mxu0
        %717 = vmatprep.subr.mxu0 %v601
        %718 = vmatpush1.msra.mxu0 %v600
        %719 = vmatprep.subr.mxu0 %v605
        %720 = vmatpush1.msra.mxu0 %v604
        %721 = vmatprep.subr.mxu0 %v609
        %722 = vmatpush1.msra.mxu0 %v608
        %723 = vmatprep.subr.mxu0 %v613
        %724 = vmatpush1.msra.mxu0 %v612
        %725 = vmatprep.subr.mxu0 %v644
        %726 = vmatpush1.msra.mxu0 %v642
        %727 = vmatprep.subr.mxu0 0.0
        %728 = vmatpush1.msra.mxu0 0.0
        %729 = vmatprep.subr.mxu0 0.0
        %730 = vmatpush1.msra.mxu0 0.0
        %731 = vmatprep.subr.mxu0 0.0
        %732 = vmatpush1.msra.mxu0 0.0
        %733 = vmatprep.subr.mxu0 0.0
        %734 = vmatpush1.msra.mxu0 0.0
        %735 = vmatprep.subr.mxu0 0.0
        %736 = vmatpush1.msra.mxu0 0.0
        %737 = vmatprep.subr.mxu0 0.0
        %738 = vmatpush1.msra.mxu0 0.0
        %739 = vmatprep.subr.mxu0 0.0
        %740 = vmatpush1.msra.mxu0 0.0
        %741 = vmatprep.subr.mxu0 0.0
        %742 = vmatpush1.msra.mxu0 0.0
        %743 = vmatprep.subr.mxu0 0.0
        %744 = vmatpush1.msra.mxu0 0.0
        %745 = vmatprep.subr.mxu0 0.0
        %746 = vmatpush1.msra.mxu0 0.0
        %747 = vmatprep.subr.mxu0 0.0
        %748 = vmatpush1.msra.mxu0 0.0
        %749 = vmatprep.subr.mxu0 0.0
        %750 = vmatpush1.msra.mxu0 0.0
        %751 = vmatprep.subr.mxu0 0.0
        %752 = vmatpush1.msra.mxu0 0.0
        %753 = vmatprep.subr.mxu0 0.0
        %754 = vmatpush1.msra.mxu0 0.0
        %755 = vmatprep.subr.mxu0 0.0
        %756 = vmatpush1.msra.mxu0 0.0
        %757 = vmatprep.subr.mxu0 0.0
        %758 = vmatpush1.msra.mxu0 0.0
        %759 = vmatprep.subr.mxu0 0.0
        %760 = vmatpush1.msra.mxu0 0.0
        %761 = vmatprep.subr.mxu0 0.0
        %762 = vmatpush1.msra.mxu0 0.0
        %763 = vmatprep.subr.mxu0 0.0
        %764 = vmatpush1.msra.mxu0 0.0
        %765 = vmatprep.subr.mxu0 0.0
        %766 = vmatpush1.msra.mxu0 0.0
        %767 = vmatprep.subr.mxu0 0.0
        %768 = vmatpush1.msra.mxu0 0.0
        %769 = vmatprep.subr.mxu0 0.0
        %770 = vmatpush1.msra.mxu0 0.0
        %771 = vmatprep.subr.mxu0 0.0
        %772 = vmatpush1.msra.mxu0 0.0
        %773 = vmatprep.subr.mxu0 0.0
        %774 = vmatpush1.msra.mxu0 0.0
        %775 = vmatprep.subr.mxu0 0.0
        %776 = vmatpush1.msra.mxu0 0.0
        %777 = vmatprep.subr.mxu0 0.0
        %778 = vmatpush1.msra.mxu0 0.0
        %779 = vmatprep.subr.mxu0 0.0
        %780 = vmatpush1.msra.mxu0 0.0
        %781 = vmatprep.mubr.f32.mxu0 0.0
        %782 = vmatmul.mubr.f32.gmra.mrb[0].mxu0 %v636
        %v783 = vpop.f32.mrb[0].mxu0
        %v784 = vadd.f32 0.0, %v783
        %v785 = vpop.f32.mrb[0].mxu0
        %v786 = vadd.f32 0.0, %v785
        %787 = vdwg.mxu0
        %v789 = vsel %vm634, %v475, 0
        %v791 = vsel %vm458, %v455, 0
        %v793 = vsel %vm458, %v456, 0
        %v795 = vsel %vm458, %v457, 0
        %v797 = vsel %vm458, %v453, 0
        %799 = vmatprep.subr.mxu0 %v460
        %800 = vmatpush1.msra.mxu0 %v459
        %801 = vmatprep.subr.mxu0 %v464
        %802 = vmatpush1.msra.mxu0 %v463
        %803 = vmatprep.subr.mxu0 %v468
        %804 = vmatpush1.msra.mxu0 %v467
        %805 = vmatprep.subr.mxu0 %v472
        %806 = vmatpush1.msra.mxu0 %v471
        %807 = vmatprep.subr.mxu0 %v793
        %808 = vmatpush1.msra.mxu0 %v791
        %809 = vmatprep.subr.mxu0 0.0
        %810 = vmatpush1.msra.mxu0 0.0
        %811 = vmatprep.subr.mxu0 0.0
        %812 = vmatpush1.msra.mxu0 0.0
        %813 = vmatprep.subr.mxu0 0.0
        %814 = vmatpush1.msra.mxu0 0.0
        %815 = vmatprep.subr.mxu0 0.0
        %816 = vmatpush1.msra.mxu0 0.0
        %817 = vmatprep.subr.mxu0 0.0
        %818 = vmatpush1.msra.mxu0 0.0
        %819 = vmatprep.subr.mxu0 0.0
        %820 = vmatpush1.msra.mxu0 0.0
        %821 = vmatprep.subr.mxu0 0.0
        %822 = vmatpush1.msra.mxu0 0.0
        %823 = vmatprep.subr.mxu0 0.0
        %824 = vmatpush1.msra.mxu0 0.0
        %825 = vmatprep.subr.mxu0 0.0
        %826 = vmatpush1.msra.mxu0 0.0
        %827 = vmatprep.subr.mxu0 0.0
        %828 = vmatpush1.msra.mxu0 0.0
        %829 = vmatprep.subr.mxu0 0.0
        %830 = vmatpush1.msra.mxu0 0.0
        %831 = vmatprep.subr.mxu0 0.0
        %832 = vmatpush1.msra.mxu0 0.0
        %833 = vmatprep.subr.mxu0 0.0
        %834 = vmatpush1.msra.mxu0 0.0
        %835 = vmatprep.subr.mxu0 0.0
        %836 = vmatpush1.msra.mxu0 0.0
        %837 = vmatprep.subr.mxu0 0.0
        %838 = vmatpush1.msra.mxu0 0.0
        %839 = vmatprep.subr.mxu0 0.0
        %840 = vmatpush1.msra.mxu0 0.0
        %841 = vmatprep.subr.mxu0 0.0
        %842 = vmatpush1.msra.mxu0 0.0
        %843 = vmatprep.subr.mxu0 0.0
        %844 = vmatpush1.msra.mxu0 0.0
        %845 = vmatprep.subr.mxu0 0.0
        %846 = vmatpush1.msra.mxu0 0.0
        %847 = vmatprep.subr.mxu0 0.0
        %848 = vmatpush1.msra.mxu0 0.0
        %849 = vmatprep.subr.mxu0 0.0
        %850 = vmatpush1.msra.mxu0 0.0
        %851 = vmatprep.subr.mxu0 0.0
        %852 = vmatpush1.msra.mxu0 0.0
        %853 = vmatprep.subr.mxu0 0.0
        %854 = vmatpush1.msra.mxu0 0.0
        %855 = vmatprep.subr.mxu0 0.0
        %856 = vmatpush1.msra.mxu0 0.0
        %857 = vmatprep.subr.mxu0 0.0
        %858 = vmatpush1.msra.mxu0 0.0
        %859 = vmatprep.subr.mxu0 0.0
        %860 = vmatpush1.msra.mxu0 0.0
        %861 = vmatprep.subr.mxu0 0.0
        %862 = vmatpush1.msra.mxu0 0.0
        %863 = vmatprep.mubr.f32.mxu0 0.0
        %864 = vmatmul.mubr.f32.gmra.mrb[0].mxu0 %v789
        %v865 = vpop.f32.mrb[0].mxu0
        %v866 = vadd.f32 %v713, %v865
        %v867 = vpop.f32.mrb[0].mxu0
        %v868 = vadd.f32 %v715, %v867
        %869 = vdwg.mxu0
        %870 = vmatprep.subr.mxu0 %v462
        %871 = vmatpush1.msra.mxu0 %v461
        %872 = vmatprep.subr.mxu0 %v466
        %873 = vmatpush1.msra.mxu0 %v465
        %874 = vmatprep.subr.mxu0 %v470
        %875 = vmatpush1.msra.mxu0 %v469
        %876 = vmatprep.subr.mxu0 %v474
        %877 = vmatpush1.msra.mxu0 %v473
        %878 = vmatprep.subr.mxu0 %v797
        %879 = vmatpush1.msra.mxu0 %v795
        %880 = vmatprep.subr.mxu0 0.0
        %881 = vmatpush1.msra.mxu0 0.0
        %882 = vmatprep.subr.mxu0 0.0
        %883 = vmatpush1.msra.mxu0 0.0
        %884 = vmatprep.subr.mxu0 0.0
        %885 = vmatpush1.msra.mxu0 0.0
        %886 = vmatprep.subr.mxu0 0.0
        %887 = vmatpush1.msra.mxu0 0.0
        %888 = vmatprep.subr.mxu0 0.0
        %889 = vmatpush1.msra.mxu0 0.0
        %890 = vmatprep.subr.mxu0 0.0
        %891 = vmatpush1.msra.mxu0 0.0
        %892 = vmatprep.subr.mxu0 0.0
        %893 = vmatpush1.msra.mxu0 0.0
        %894 = vmatprep.subr.mxu0 0.0
        %895 = vmatpush1.msra.mxu0 0.0
        %896 = vmatprep.subr.mxu0 0.0
        %897 = vmatpush1.msra.mxu0 0.0
        %898 = vmatprep.subr.mxu0 0.0
        %899 = vmatpush1.msra.mxu0 0.0
        %900 = vmatprep.subr.mxu0 0.0
        %901 = vmatpush1.msra.mxu0 0.0
        %902 = vmatprep.subr.mxu0 0.0
        %903 = vmatpush1.msra.mxu0 0.0
        %904 = vmatprep.subr.mxu0 0.0
        %905 = vmatpush1.msra.mxu0 0.0
        %906 = vmatprep.subr.mxu0 0.0
        %907 = vmatpush1.msra.mxu0 0.0
        %908 = vmatprep.subr.mxu0 0.0
        %909 = vmatpush1.msra.mxu0 0.0
        %910 = vmatprep.subr.mxu0 0.0
        %911 = vmatpush1.msra.mxu0 0.0
        %912 = vmatprep.subr.mxu0 0.0
        %913 = vmatpush1.msra.mxu0 0.0
        %914 = vmatprep.subr.mxu0 0.0
        %915 = vmatpush1.msra.mxu0 0.0
        %916 = vmatprep.subr.mxu0 0.0
        %917 = vmatpush1.msra.mxu0 0.0
        %918 = vmatprep.subr.mxu0 0.0
        %919 = vmatpush1.msra.mxu0 0.0
        %920 = vmatprep.subr.mxu0 0.0
        %921 = vmatpush1.msra.mxu0 0.0
        %922 = vmatprep.subr.mxu0 0.0
        %923 = vmatpush1.msra.mxu0 0.0
        %924 = vmatprep.subr.mxu0 0.0
        %925 = vmatpush1.msra.mxu0 0.0
        %926 = vmatprep.subr.mxu0 0.0
        %927 = vmatpush1.msra.mxu0 0.0
        %928 = vmatprep.subr.mxu0 0.0
        %929 = vmatpush1.msra.mxu0 0.0
        %930 = vmatprep.subr.mxu0 0.0
        %931 = vmatpush1.msra.mxu0 0.0
        %932 = vmatprep.subr.mxu0 0.0
        %933 = vmatpush1.msra.mxu0 0.0
        %934 = vmatprep.mubr.f32.mxu0 0.0
        %935 = vmatmul.mubr.f32.gmra.mrb[0].mxu0 %v789
        %v936 = vpop.f32.mrb[0].mxu0
        %v937 = vadd.f32 %v784, %v936
        %v938 = vpop.f32.mrb[0].mxu0
        %v939 = vadd.f32 %v786, %v938
        %940 = vdwg.mxu0
        %v941 = vld [vmem:[%s290 + $0x4] sm:$0xff]
        %v942 = vld [vmem:[%s290 + $0xc] sm:$0xff]
        %v943 = vld [vmem:[%s290 + $0x14] sm:$0xf]
        %v947 = vcombine.high %v941, %v941
        %v948 = vcombine.high %v942, %v942
        %v951 = vcombine.low %v941, %v941
        %v952 = vcombine.low %v942, %v942
        %v953 = vcombine.low %v943, %v943
        %954 = vrot.lane.b32.xlu0 %v951, 127
        %v955 = vpop.permute.xlu0 %954
        %956 = vrot.lane.b32.xlu0 %v941, 127
        %v957 = vpop.permute.xlu0 %956
        %958 = vrot.lane.b32.xlu0 %v952, 127
        %v959 = vpop.permute.xlu0 %958
        %960 = vrot.lane.b32.xlu0 %v942, 127
        %v961 = vpop.permute.xlu0 %960
        %962 = vrot.lane.b32.xlu0 %v953, 127
        %v963 = vpop.permute.xlu0 %962
        %v964 = vsel %vm342, %v955, %v957
        %v965 = vsel %vm342, %v957, %v959
        %v966 = vsel %vm342, %v959, %v961
        %v967 = vsel %vm342, %v961, %v963
        %973 = vrot.lane.b32.xlu0 %v941, 126
        %v974 = vpop.permute.xlu0 %973
        %975 = vrot.lane.b32.xlu0 %v947, 126
        %v976 = vpop.permute.xlu0 %975
        %977 = vrot.lane.b32.xlu0 %v942, 126
        %v978 = vpop.permute.xlu0 %977
        %979 = vrot.lane.b32.xlu0 %v948, 126
        %v980 = vpop.permute.xlu0 %979
        %981 = vrot.lane.b32.xlu0 %v943, 126
        %v982 = vpop.permute.xlu0 %981
        %v983 = vsel %vm358, %v974, %v976
        %v984 = vsel %vm358, %v976, %v978
        %v985 = vsel %vm358, %v978, %v980
        %v986 = vsel %vm358, %v980, %v982
        %992 = vrot.lane.b32.xlu0 %v951, 118
        %v993 = vpop.permute.xlu0 %992
        %994 = vrot.lane.b32.xlu0 %v941, 118
        %v995 = vpop.permute.xlu0 %994
        %996 = vrot.lane.b32.xlu0 %v952, 118
        %v997 = vpop.permute.xlu0 %996
        %998 = vrot.lane.b32.xlu0 %v942, 118
        %v999 = vpop.permute.xlu0 %998
        %1000 = vrot.lane.b32.xlu0 %v953, 118
        %v1001 = vpop.permute.xlu0 %1000
        %v1002 = vsel %vm374, %v993, %v995
        %v1003 = vsel %vm374, %v995, %v997
        %v1004 = vsel %vm374, %v997, %v999
        %v1005 = vsel %vm374, %v999, %v1001
        %1011 = vrot.lane.b32.xlu0 %v941, 117
        %v1012 = vpop.permute.xlu0 %1011
        %1013 = vrot.lane.b32.xlu0 %v947, 117
        %v1014 = vpop.permute.xlu0 %1013
        %1015 = vrot.lane.b32.xlu0 %v942, 117
        %v1016 = vpop.permute.xlu0 %1015
        %1017 = vrot.lane.b32.xlu0 %v948, 117
        %v1018 = vpop.permute.xlu0 %1017
        %1019 = vrot.lane.b32.xlu0 %v943, 117
        %v1020 = vpop.permute.xlu0 %1019
        %v1021 = vsel %vm390, %v1012, %v1014
        %v1022 = vsel %vm390, %v1014, %v1016
        %v1023 = vsel %vm390, %v1016, %v1018
        %v1024 = vsel %vm390, %v1018, %v1020
        %1030 = vrot.lane.b32.xlu0 %v951, 116
        %v1031 = vpop.permute.xlu0 %1030
        %1032 = vrot.lane.b32.xlu0 %v941, 116
        %v1033 = vpop.permute.xlu0 %1032
        %1034 = vrot.lane.b32.xlu0 %v952, 116
        %v1035 = vpop.permute.xlu0 %1034
        %1036 = vrot.lane.b32.xlu0 %v942, 116
        %v1037 = vpop.permute.xlu0 %1036
        %1038 = vrot.lane.b32.xlu0 %v953, 116
        %v1039 = vpop.permute.xlu0 %1038
        %v1040 = vsel %vm406, %v1031, %v1033
        %v1041 = vsel %vm406, %v1033, %v1035
        %v1042 = vsel %vm406, %v1035, %v1037
        %v1043 = vsel %vm406, %v1037, %v1039
        %1049 = vrot.lane.b32.xlu0 %v941, 108
        %v1050 = vpop.permute.xlu0 %1049
        %1051 = vrot.lane.b32.xlu0 %v947, 108
        %v1052 = vpop.permute.xlu0 %1051
        %1053 = vrot.lane.b32.xlu0 %v942, 108
        %v1054 = vpop.permute.xlu0 %1053
        %1055 = vrot.lane.b32.xlu0 %v948, 108
        %v1056 = vpop.permute.xlu0 %1055
        %1057 = vrot.lane.b32.xlu0 %v943, 108
        %v1058 = vpop.permute.xlu0 %1057
        %v1059 = vsel %vm422, %v1050, %v1052
        %v1060 = vsel %vm422, %v1052, %v1054
        %v1061 = vsel %vm422, %v1054, %v1056
        %v1062 = vsel %vm422, %v1056, %v1058
        %1068 = vrot.lane.b32.xlu0 %v951, 107
        %v1069 = vpop.permute.xlu0 %1068
        %1070 = vrot.lane.b32.xlu0 %v941, 107
        %v1071 = vpop.permute.xlu0 %1070
        %1072 = vrot.lane.b32.xlu0 %v952, 107
        %v1073 = vpop.permute.xlu0 %1072
        %1074 = vrot.lane.b32.xlu0 %v942, 107
        %v1075 = vpop.permute.xlu0 %1074
        %1076 = vrot.lane.b32.xlu0 %v953, 107
        %v1077 = vpop.permute.xlu0 %1076
        %v1078 = vsel %vm438, %v1069, %v1071
        %v1079 = vsel %vm438, %v1071, %v1073
        %v1080 = vsel %vm438, %v1073, %v1075
        %v1081 = vsel %vm438, %v1075, %v1077
        %1087 = vrot.lane.b32.xlu0 %v941, 106
        %v1088 = vpop.permute.xlu0 %1087
        %1089 = vrot.lane.b32.xlu0 %v947, 106
        %v1090 = vpop.permute.xlu0 %1089
        %1091 = vrot.lane.b32.xlu0 %v942, 106
        %v1092 = vpop.permute.xlu0 %1091
        %1093 = vrot.lane.b32.xlu0 %v948, 106
        %v1094 = vpop.permute.xlu0 %1093
        %1095 = vrot.lane.b32.xlu0 %v943, 106
        %v1096 = vpop.permute.xlu0 %1095
        %v1097 = vsel %vm454, %v1088, %v1090
        %v1098 = vsel %vm454, %v1090, %v1092
        %v1099 = vsel %vm454, %v1092, %v1094
        %v1100 = vsel %vm454, %v1094, %v1096
        %v1101 = vsel %vm458, %v941, %v964
        %v1102 = vsel %vm458, %v947, %v965
        %v1103 = vsel %vm458, %v942, %v966
        %v1104 = vsel %vm458, %v948, %v967
        %v1105 = vsel %vm458, %v943, %v963
        %v1106 = vsel %vm458, %v983, %v1002
        %v1107 = vsel %vm458, %v984, %v1003
        %v1108 = vsel %vm458, %v985, %v1004
        %v1109 = vsel %vm458, %v986, %v1005
        %v1110 = vsel %vm458, %v982, %v1001
        %v1111 = vsel %vm458, %v1021, %v1040
        %v1112 = vsel %vm458, %v1022, %v1041
        %v1113 = vsel %vm458, %v1023, %v1042
        %v1114 = vsel %vm458, %v1024, %v1043
        %v1115 = vsel %vm458, %v1020, %v1039
        %v1116 = vsel %vm458, %v1059, %v1078
        %v1117 = vsel %vm458, %v1060, %v1079
        %v1118 = vsel %vm458, %v1061, %v1080
        %v1119 = vsel %vm458, %v1062, %v1081
        %v1120 = vsel %vm458, %v1058, %v1077
        %s1121 = scalar_lea.vmem %s2, 8
        %v1122 = vld [vmem:[%s1121] sm:$0xf]
        %1143 = vrot.lane.b32.xlu0 %v1101, 56
        %v1144 = vpop.permute.xlu0 %1143
        %1145 = vrot.lane.b32.xlu0 %v1102, 56
        %v1146 = vpop.permute.xlu0 %1145
        %1147 = vrot.lane.b32.xlu0 %v1103, 56
        %v1148 = vpop.permute.xlu0 %1147
        %1149 = vrot.lane.b32.xlu0 %v1104, 56
        %v1150 = vpop.permute.xlu0 %1149
        %1151 = vrot.lane.b32.xlu0 %v1105, 56
        %v1152 = vpop.permute.xlu0 %1151
        %1153 = vrot.lane.b32.xlu0 %v1106, 56
        %v1154 = vpop.permute.xlu0 %1153
        %1155 = vrot.lane.b32.xlu0 %v1107, 56
        %v1156 = vpop.permute.xlu0 %1155
        %1157 = vrot.lane.b32.xlu0 %v1108, 56
        %v1158 = vpop.permute.xlu0 %1157
        %1159 = vrot.lane.b32.xlu0 %v1109, 56
        %v1160 = vpop.permute.xlu0 %1159
        %1161 = vrot.lane.b32.xlu0 %v1110, 56
        %v1162 = vpop.permute.xlu0 %1161
        %1163 = vrot.lane.b32.xlu0 %v1111, 56
        %v1164 = vpop.permute.xlu0 %1163
        %1165 = vrot.lane.b32.xlu0 %v1112, 56
        %v1166 = vpop.permute.xlu0 %1165
        %1167 = vrot.lane.b32.xlu0 %v1113, 56
        %v1168 = vpop.permute.xlu0 %1167
        %1169 = vrot.lane.b32.xlu0 %v1114, 56
        %v1170 = vpop.permute.xlu0 %1169
        %1171 = vrot.lane.b32.xlu0 %v1115, 56
        %v1172 = vpop.permute.xlu0 %1171
        %1173 = vrot.lane.b32.xlu0 %v1116, 56
        %v1174 = vpop.permute.xlu0 %1173
        %1175 = vrot.lane.b32.xlu0 %v1117, 56
        %v1176 = vpop.permute.xlu0 %1175
        %1177 = vrot.lane.b32.xlu0 %v1118, 56
        %v1178 = vpop.permute.xlu0 %1177
        %1179 = vrot.lane.b32.xlu0 %v1119, 56
        %v1180 = vpop.permute.xlu0 %1179
        %1181 = vrot.lane.b32.xlu0 %v1120, 56
        %v1182 = vpop.permute.xlu0 %1181
        %1183 = vrot.lane.b32.xlu0 %v1097, 56
        %v1184 = vpop.permute.xlu0 %1183
        %1185 = vrot.lane.b32.xlu0 %v1098, 56
        %v1186 = vpop.permute.xlu0 %1185
        %1187 = vrot.lane.b32.xlu0 %v1099, 56
        %v1188 = vpop.permute.xlu0 %1187
        %1189 = vrot.lane.b32.xlu0 %v1100, 56
        %v1190 = vpop.permute.xlu0 %1189
        %1191 = vrot.lane.b32.xlu0 %v1096, 56
        %v1192 = vpop.permute.xlu0 %1191
        %vm1193 = vcmask 457728
        %v1194 = vsel %vm1193, %v1144, %v1146
        %v1195 = vsel %vm1193, %v1146, %v1148
        %v1196 = vsel %vm1193, %v1148, %v1150
        %v1197 = vsel %vm1193, %v1150, %v1152
        %v1198 = vsel %vm1193, %v1154, %v1156
        %v1199 = vsel %vm1193, %v1156, %v1158
        %v1200 = vsel %vm1193, %v1158, %v1160
        %v1201 = vsel %vm1193, %v1160, %v1162
        %v1202 = vsel %vm1193, %v1164, %v1166
        %v1203 = vsel %vm1193, %v1166, %v1168
        %v1204 = vsel %vm1193, %v1168, %v1170
        %v1205 = vsel %vm1193, %v1170, %v1172
        %v1206 = vsel %vm1193, %v1174, %v1176
        %v1207 = vsel %vm1193, %v1176, %v1178
        %v1208 = vsel %vm1193, %v1178, %v1180
        %v1209 = vsel %vm1193, %v1180, %v1182
        %v1210 = vsel %vm1193, %v1184, %v1186
        %v1211 = vsel %vm1193, %v1186, %v1188
        %v1212 = vsel %vm1193, %v1188, %v1190
        %v1213 = vsel %vm1193, %v1190, %v1192
        %v1231 = vsel %vm634, %v1122, 0
        %v1233 = vsel %vm458, %v1210, 0
        %v1235 = vsel %vm458, %v1211, 0
        %v1237 = vsel %vm458, %v1212, 0
        %v1239 = vsel %vm458, %v1213, 0
        %1241 = vmatprep.subr.mxu0 %v1195
        %1242 = vmatpush1.msra.mxu0 %v1194
        %1243 = vmatprep.subr.mxu0 %v1199
        %1244 = vmatpush1.msra.mxu0 %v1198
        %1245 = vmatprep.subr.mxu0 %v1203
        %1246 = vmatpush1.msra.mxu0 %v1202
        %1247 = vmatprep.subr.mxu0 %v1207
        %1248 = vmatpush1.msra.mxu0 %v1206
        %1249 = vmatprep.subr.mxu0 %v1235
        %1250 = vmatpush1.msra.mxu0 %v1233
        %1251 = vmatprep.subr.mxu0 0.0
        %1252 = vmatpush1.msra.mxu0 0.0
        %1253 = vmatprep.subr.mxu0 0.0
        %1254 = vmatpush1.msra.mxu0 0.0
        %1255 = vmatprep.subr.mxu0 0.0
        %1256 = vmatpush1.msra.mxu0 0.0
        %1257 = vmatprep.subr.mxu0 0.0
        %1258 = vmatpush1.msra.mxu0 0.0
        %1259 = vmatprep.subr.mxu0 0.0
        %1260 = vmatpush1.msra.mxu0 0.0
        %1261 = vmatprep.subr.mxu0 0.0
        %1262 = vmatpush1.msra.mxu0 0.0
        %1263 = vmatprep.subr.mxu0 0.0
        %1264 = vmatpush1.msra.mxu0 0.0
        %1265 = vmatprep.subr.mxu0 0.0
        %1266 = vmatpush1.msra.mxu0 0.0
        %1267 = vmatprep.subr.mxu0 0.0
        %1268 = vmatpush1.msra.mxu0 0.0
        %1269 = vmatprep.subr.mxu0 0.0
        %1270 = vmatpush1.msra.mxu0 0.0
        %1271 = vmatprep.subr.mxu0 0.0
        %1272 = vmatpush1.msra.mxu0 0.0
        %1273 = vmatprep.subr.mxu0 0.0
        %1274 = vmatpush1.msra.mxu0 0.0
        %1275 = vmatprep.subr.mxu0 0.0
        %1276 = vmatpush1.msra.mxu0 0.0
        %1277 = vmatprep.subr.mxu0 0.0
        %1278 = vmatpush1.msra.mxu0 0.0
        %1279 = vmatprep.subr.mxu0 0.0
        %1280 = vmatpush1.msra.mxu0 0.0
        %1281 = vmatprep.subr.mxu0 0.0
        %1282 = vmatpush1.msra.mxu0 0.0
        %1283 = vmatprep.subr.mxu0 0.0
        %1284 = vmatpush1.msra.mxu0 0.0
        %1285 = vmatprep.subr.mxu0 0.0
        %1286 = vmatpush1.msra.mxu0 0.0
        %1287 = vmatprep.subr.mxu0 0.0
        %1288 = vmatpush1.msra.mxu0 0.0
        %1289 = vmatprep.subr.mxu0 0.0
        %1290 = vmatpush1.msra.mxu0 0.0
        %1291 = vmatprep.subr.mxu0 0.0
        %1292 = vmatpush1.msra.mxu0 0.0
        %1293 = vmatprep.subr.mxu0 0.0
        %1294 = vmatpush1.msra.mxu0 0.0
        %1295 = vmatprep.subr.mxu0 0.0
        %1296 = vmatpush1.msra.mxu0 0.0
        %1297 = vmatprep.subr.mxu0 0.0
        %1298 = vmatpush1.msra.mxu0 0.0
        %1299 = vmatprep.subr.mxu0 0.0
        %1300 = vmatpush1.msra.mxu0 0.0
        %1301 = vmatprep.subr.mxu0 0.0
        %1302 = vmatpush1.msra.mxu0 0.0
        %1303 = vmatprep.subr.mxu0 0.0
        %1304 = vmatpush1.msra.mxu0 0.0
        %1305 = vmatprep.mubr.f32.mxu0 0.0
        %1306 = vmatmul.mubr.f32.gmra.mrb[0].mxu0 %v1231
        %v1307 = vpop.f32.mrb[0].mxu0
        %v1308 = vadd.f32 0.0, %v1307
        %v1309 = vpop.f32.mrb[0].mxu0
        %v1310 = vadd.f32 0.0, %v1309
        %1311 = vdwg.mxu0
        %1312 = vmatprep.subr.mxu0 %v1197
        %1313 = vmatpush1.msra.mxu0 %v1196
        %1314 = vmatprep.subr.mxu0 %v1201
        %1315 = vmatpush1.msra.mxu0 %v1200
        %1316 = vmatprep.subr.mxu0 %v1205
        %1317 = vmatpush1.msra.mxu0 %v1204
        %1318 = vmatprep.subr.mxu0 %v1209
        %1319 = vmatpush1.msra.mxu0 %v1208
        %1320 = vmatprep.subr.mxu0 %v1239
        %1321 = vmatpush1.msra.mxu0 %v1237
        %1322 = vmatprep.subr.mxu0 0.0
        %1323 = vmatpush1.msra.mxu0 0.0
        %1324 = vmatprep.subr.mxu0 0.0
        %1325 = vmatpush1.msra.mxu0 0.0
        %1326 = vmatprep.subr.mxu0 0.0
        %1327 = vmatpush1.msra.mxu0 0.0
        %1328 = vmatprep.subr.mxu0 0.0
        %1329 = vmatpush1.msra.mxu0 0.0
        %1330 = vmatprep.subr.mxu0 0.0
        %1331 = vmatpush1.msra.mxu0 0.0
        %1332 = vmatprep.subr.mxu0 0.0
        %1333 = vmatpush1.msra.mxu0 0.0
        %1334 = vmatprep.subr.mxu0 0.0
        %1335 = vmatpush1.msra.mxu0 0.0
        %1336 = vmatprep.subr.mxu0 0.0
        %1337 = vmatpush1.msra.mxu0 0.0
        %1338 = vmatprep.subr.mxu0 0.0
        %1339 = vmatpush1.msra.mxu0 0.0
        %1340 = vmatprep.subr.mxu0 0.0
        %1341 = vmatpush1.msra.mxu0 0.0
        %1342 = vmatprep.subr.mxu0 0.0
        %1343 = vmatpush1.msra.mxu0 0.0
        %1344 = vmatprep.subr.mxu0 0.0
        %1345 = vmatpush1.msra.mxu0 0.0
        %1346 = vmatprep.subr.mxu0 0.0
        %1347 = vmatpush1.msra.mxu0 0.0
        %1348 = vmatprep.subr.mxu0 0.0
        %1349 = vmatpush1.msra.mxu0 0.0
        %1350 = vmatprep.subr.mxu0 0.0
        %1351 = vmatpush1.msra.mxu0 0.0
        %1352 = vmatprep.subr.mxu0 0.0
        %1353 = vmatpush1.msra.mxu0 0.0
        %1354 = vmatprep.subr.mxu0 0.0
        %1355 = vmatpush1.msra.mxu0 0.0
        %1356 = vmatprep.subr.mxu0 0.0
        %1357 = vmatpush1.msra.mxu0 0.0
        %1358 = vmatprep.subr.mxu0 0.0
        %1359 = vmatpush1.msra.mxu0 0.0
        %1360 = vmatprep.subr.mxu0 0.0
        %1361 = vmatpush1.msra.mxu0 0.0
        %1362 = vmatprep.subr.mxu0 0.0
        %1363 = vmatpush1.msra.mxu0 0.0
        %1364 = vmatprep.subr.mxu0 0.0
        %1365 = vmatpush1.msra.mxu0 0.0
        %1366 = vmatprep.subr.mxu0 0.0
        %1367 = vmatpush1.msra.mxu0 0.0
        %1368 = vmatprep.subr.mxu0 0.0
        %1369 = vmatpush1.msra.mxu0 0.0
        %1370 = vmatprep.subr.mxu0 0.0
        %1371 = vmatpush1.msra.mxu0 0.0
        %1372 = vmatprep.subr.mxu0 0.0
        %1373 = vmatpush1.msra.mxu0 0.0
        %1374 = vmatprep.subr.mxu0 0.0
        %1375 = vmatpush1.msra.mxu0 0.0
        %1376 = vmatprep.mubr.f32.mxu0 0.0
        %1377 = vmatmul.mubr.f32.gmra.mrb[0].mxu0 %v1231
        %v1378 = vpop.f32.mrb[0].mxu0
        %v1379 = vadd.f32 0.0, %v1378
        %v1380 = vpop.f32.mrb[0].mxu0
        %v1381 = vadd.f32 0.0, %v1380
        %1382 = vdwg.mxu0
        %v1383 = vadd.f32 %v866, %v1308
        %v1384 = vadd.f32 %v868, %v1310
        %v1385 = vadd.f32 %v937, %v1379
        %v1386 = vadd.f32 %v939, %v1381
        %v1387 = vld [vmem:[%s3] sm:$0xf]
        %1389 = vset.pattern.permute.xlu0 0
        %1390 = vperm.xlu0 %1389, %v1387
        %v1391 = vpop.permute.xlu0 %1390
        %v1393 = vadd.f32 %v1383, %v1391
        %v1394 = vadd.f32 %v1384, %v1391
        %v1395 = vadd.f32 %v1385, %v1391
        %v1396 = vadd.f32 %v1386, %v1391
        %v1397 = vmax.f32 %v1393, 0.0
        %v1398 = vmax.f32 %v1394, 0.0
        %v1399 = vmax.f32 %v1395, 0.0
        %v1400 = vmax.f32 %v1396, 0.0
        %v1401 = vld [vmem:[%s281] sm:$0xf]
        %v1403 = vlaneseq
        %v1404 = vshrl.u32 %v1403, 7
        %v1405 = vsub.s32 0, %v1404
        %v1406 = vrot.slane %v1401, %v1405
        %v1407 = vlaneseq
        %v1408 = vshrl.u32 %v1407, 7
        %v1409 = vsub.s32 1, %v1408
        %v1410 = vrot.slane %v1401, %v1409
        %v1411 = vlaneseq
        %v1412 = vshrl.u32 %v1411, 7
        %v1413 = vsub.s32 2, %v1412
        %v1414 = vrot.slane %v1401, %v1413
        %v1415 = vlaneseq
        %v1416 = vshrl.u32 %v1415, 7
        %v1417 = vsub.s32 3, %v1416
        %v1418 = vrot.slane %v1401, %v1417
        %v1423 = vmul.f32 %v1397, %v1406
        %v1424 = vmul.f32 %v1398, %v1410
        %v1425 = vmul.f32 %v1399, %v1414
        %v1426 = vmul.f32 %v1400, %v1418
        %vm1427 = vcmask 84992
        %1428 = vst.msk [vmem:[#allocation2] sm:$0xf] %vm1427, 0.0
        %vm1429 = vcmask 1044296
        %vm1430 = vcmask 1047556
        %vm1431 = vmor %vm1430, %vm1429
        %1432 = vst.msk [vmem:[#allocation2 + $0xc] sm:$0xff] %vm1431, 0.0
        %v1437 = vcombine.low %v1423, %v1424
        %v1438 = vcombine.low %v1425, %v1426
        %1439 = vrot.lane.b32.xlu0 %v1437, 11
        %v1440 = vpop.permute.xlu0 %1439
        %1441 = vrot.lane.b32.xlu0 %v1438, 11
        %v1442 = vpop.permute.xlu0 %1441
        %v1443 = vrot.slane %v1440, 4
        %v1444 = vrot.slane %v1442, 4
        %vm1445 = vcmask 89088
        %v1446 = vsel %vm1445, %v1443, %v1440
        %v1447 = vsel %vm458, %v1443, %v1444
        %v1448 = vsel %vm1445, %v1447, %v1442
        %vm1451 = vcmask 1043544
        %vm1452 = vmor %vm1430, %vm1451
        %1453 = vst.msk [vmem:[#allocation2] sm:$0xff] %vm1452, %v1446
        %vm1454 = vcmask 859140
        %vm1455 = vmor %vm1454, %vm458
        %1456 = vst.msk [vmem:[#allocation2 + $0x8] sm:$0xff] %vm1455, %v1448
        %v1457 = vld [vmem:[#allocation2] sm:$0xff]
        %v1458 = vld [vmem:[#allocation2 + $0x8] sm:$0xf]
        %v1461 = vcombine.high %v1457, %v1457
        %v1463 = vcombine.low %v1457, %v1457
        %v1464 = vcombine.low %v1458, %v1458
        %1465 = vrot.lane.b32.xlu0 %v1463, 127
        %v1466 = vpop.permute.xlu0 %1465
        %1467 = vrot.lane.b32.xlu0 %v1457, 127
        %v1468 = vpop.permute.xlu0 %1467
        %1469 = vrot.lane.b32.xlu0 %v1464, 127
        %v1470 = vpop.permute.xlu0 %1469
        %v1471 = vsel %vm342, %v1466, %v1468
        %v1472 = vsel %vm342, %v1468, %v1470
        %1476 = vrot.lane.b32.xlu0 %v1457, 126
        %v1477 = vpop.permute.xlu0 %1476
        %1478 = vrot.lane.b32.xlu0 %v1461, 126
        %v1479 = vpop.permute.xlu0 %1478
        %1480 = vrot.lane.b32.xlu0 %v1458, 126
        %v1481 = vpop.permute.xlu0 %1480
        %v1482 = vsel %vm358, %v1477, %v1479
        %v1483 = vsel %vm358, %v1479, %v1481
        %1487 = vrot.lane.b32.xlu0 %v1463, 118
        %v1488 = vpop.permute.xlu0 %1487
        %1489 = vrot.lane.b32.xlu0 %v1457, 118
        %v1490 = vpop.permute.xlu0 %1489
        %1491 = vrot.lane.b32.xlu0 %v1464, 118
        %v1492 = vpop.permute.xlu0 %1491
        %v1493 = vsel %vm374, %v1488, %v1490
        %v1494 = vsel %vm374, %v1490, %v1492
        %1498 = vrot.lane.b32.xlu0 %v1457, 117
        %v1499 = vpop.permute.xlu0 %1498
        %1500 = vrot.lane.b32.xlu0 %v1461, 117
        %v1501 = vpop.permute.xlu0 %1500
        %1502 = vrot.lane.b32.xlu0 %v1458, 117
        %v1503 = vpop.permute.xlu0 %1502
        %v1504 = vsel %vm390, %v1499, %v1501
        %v1505 = vsel %vm390, %v1501, %v1503
        %1509 = vrot.lane.b32.xlu0 %v1463, 116
        %v1510 = vpop.permute.xlu0 %1509
        %1511 = vrot.lane.b32.xlu0 %v1457, 116
        %v1512 = vpop.permute.xlu0 %1511
        %1513 = vrot.lane.b32.xlu0 %v1464, 116
        %v1514 = vpop.permute.xlu0 %1513
        %v1515 = vsel %vm406, %v1510, %v1512
        %v1516 = vsel %vm406, %v1512, %v1514
        %1520 = vrot.lane.b32.xlu0 %v1457, 108
        %v1521 = vpop.permute.xlu0 %1520
        %1522 = vrot.lane.b32.xlu0 %v1461, 108
        %v1523 = vpop.permute.xlu0 %1522
        %1524 = vrot.lane.b32.xlu0 %v1458, 108
        %v1525 = vpop.permute.xlu0 %1524
        %v1526 = vsel %vm422, %v1521, %v1523
        %v1527 = vsel %vm422, %v1523, %v1525
        %1531 = vrot.lane.b32.xlu0 %v1463, 107
        %v1532 = vpop.permute.xlu0 %1531
        %1533 = vrot.lane.b32.xlu0 %v1457, 107
        %v1534 = vpop.permute.xlu0 %1533
        %1535 = vrot.lane.b32.xlu0 %v1464, 107
        %v1536 = vpop.permute.xlu0 %1535
        %v1537 = vsel %vm438, %v1532, %v1534
        %v1538 = vsel %vm438, %v1534, %v1536
        %1542 = vrot.lane.b32.xlu0 %v1457, 106
        %v1543 = vpop.permute.xlu0 %1542
        %1544 = vrot.lane.b32.xlu0 %v1461, 106
        %v1545 = vpop.permute.xlu0 %1544
        %1546 = vrot.lane.b32.xlu0 %v1458, 106
        %v1547 = vpop.permute.xlu0 %1546
        %v1548 = vsel %vm454, %v1543, %v1545
        %v1549 = vsel %vm454, %v1545, %v1547
        %v1550 = vsel %vm458, %v1457, %v1471
        %v1551 = vsel %vm458, %v1461, %v1472
        %v1552 = vsel %vm458, %v1458, %v1470
        %v1553 = vsel %vm458, %v1482, %v1493
        %v1554 = vsel %vm458, %v1483, %v1494
        %v1555 = vsel %vm458, %v1481, %v1492
        %v1556 = vsel %vm458, %v1504, %v1515
        %v1557 = vsel %vm458, %v1505, %v1516
        %v1558 = vsel %vm458, %v1503, %v1514
        %v1559 = vsel %vm458, %v1526, %v1537
        %v1560 = vsel %vm458, %v1527, %v1538
        %v1561 = vsel %vm458, %v1525, %v1536
        %v1562 = vld [vmem:[%s4] sm:$0xf]
        %v1563 = vld [vmem:[#allocation2 + $0x8] sm:$0xff]
        %v1565 = vcombine.high %v1563, %v1563
        %v1567 = vcombine.low %v1563, %v1563
        %1568 = vrot.lane.b32.xlu0 %v1567, 127
        %v1569 = vpop.permute.xlu0 %1568
        %1570 = vrot.lane.b32.xlu0 %v1563, 127
        %v1571 = vpop.permute.xlu0 %1570
        %v1572 = vsel %vm342, %v1468, %v1569
        %v1573 = vsel %vm342, %v1569, %v1571
        %1577 = vrot.lane.b32.xlu0 %v1563, 126
        %v1578 = vpop.permute.xlu0 %1577
        %1579 = vrot.lane.b32.xlu0 %v1565, 126
        %v1580 = vpop.permute.xlu0 %1579
        %v1581 = vsel %vm358, %v1479, %v1578
        %v1582 = vsel %vm358, %v1578, %v1580
        %1586 = vrot.lane.b32.xlu0 %v1567, 118
        %v1587 = vpop.permute.xlu0 %1586
        %1588 = vrot.lane.b32.xlu0 %v1563, 118
        %v1589 = vpop.permute.xlu0 %1588
        %v1590 = vsel %vm374, %v1490, %v1587
        %v1591 = vsel %vm374, %v1587, %v1589
        %1595 = vrot.lane.b32.xlu0 %v1563, 117
        %v1596 = vpop.permute.xlu0 %1595
        %1597 = vrot.lane.b32.xlu0 %v1565, 117
        %v1598 = vpop.permute.xlu0 %1597
        %v1599 = vsel %vm390, %v1501, %v1596
        %v1600 = vsel %vm390, %v1596, %v1598
        %1604 = vrot.lane.b32.xlu0 %v1567, 116
        %v1605 = vpop.permute.xlu0 %1604
        %1606 = vrot.lane.b32.xlu0 %v1563, 116
        %v1607 = vpop.permute.xlu0 %1606
        %v1608 = vsel %vm406, %v1512, %v1605
        %v1609 = vsel %vm406, %v1605, %v1607
        %1613 = vrot.lane.b32.xlu0 %v1563, 108
        %v1614 = vpop.permute.xlu0 %1613
        %1615 = vrot.lane.b32.xlu0 %v1565, 108
        %v1616 = vpop.permute.xlu0 %1615
        %v1617 = vsel %vm422, %v1523, %v1614
        %v1618 = vsel %vm422, %v1614, %v1616
        %1622 = vrot.lane.b32.xlu0 %v1567, 107
        %v1623 = vpop.permute.xlu0 %1622
        %1624 = vrot.lane.b32.xlu0 %v1563, 107
        %v1625 = vpop.permute.xlu0 %1624
        %v1626 = vsel %vm438, %v1534, %v1623
        %v1627 = vsel %vm438, %v1623, %v1625
        %1631 = vrot.lane.b32.xlu0 %v1563, 106
        %v1632 = vpop.permute.xlu0 %1631
        %1633 = vrot.lane.b32.xlu0 %v1565, 106
        %v1634 = vpop.permute.xlu0 %1633
        %v1635 = vsel %vm454, %v1545, %v1632
        %v1636 = vsel %vm454, %v1632, %v1634
        %v1637 = vsel %vm458, %v1461, %v1572
        %v1638 = vsel %vm458, %v1563, %v1573
        %v1639 = vsel %vm458, %v1565, %v1571
        %v1640 = vsel %vm458, %v1581, %v1590
        %v1641 = vsel %vm458, %v1582, %v1591
        %v1642 = vsel %vm458, %v1580, %v1589
        %v1643 = vsel %vm458, %v1599, %v1608
        %v1644 = vsel %vm458, %v1600, %v1609
        %v1645 = vsel %vm458, %v1598, %v1607
        %v1646 = vsel %vm458, %v1617, %v1626
        %v1647 = vsel %vm458, %v1618, %v1627
        %v1648 = vsel %vm458, %v1616, %v1625
        %s1649 = scalar_lea.vmem %s4, 4
        %v1650 = vld [vmem:[%s1649] sm:$0xf]
        %1667 = vrot.lane.b32.xlu0 %v1550, 28
        %v1668 = vpop.permute.xlu0 %1667
        %1669 = vrot.lane.b32.xlu0 %v1637, 28
        %v1670 = vpop.permute.xlu0 %1669
        %1671 = vrot.lane.b32.xlu0 %v1638, 28
        %v1672 = vpop.permute.xlu0 %1671
        %1673 = vrot.lane.b32.xlu0 %v1639, 28
        %v1674 = vpop.permute.xlu0 %1673
        %1675 = vrot.lane.b32.xlu0 %v1553, 28
        %v1676 = vpop.permute.xlu0 %1675
        %1677 = vrot.lane.b32.xlu0 %v1640, 28
        %v1678 = vpop.permute.xlu0 %1677
        %1679 = vrot.lane.b32.xlu0 %v1641, 28
        %v1680 = vpop.permute.xlu0 %1679
        %1681 = vrot.lane.b32.xlu0 %v1642, 28
        %v1682 = vpop.permute.xlu0 %1681
        %1683 = vrot.lane.b32.xlu0 %v1556, 28
        %v1684 = vpop.permute.xlu0 %1683
        %1685 = vrot.lane.b32.xlu0 %v1643, 28
        %v1686 = vpop.permute.xlu0 %1685
        %1687 = vrot.lane.b32.xlu0 %v1644, 28
        %v1688 = vpop.permute.xlu0 %1687
        %1689 = vrot.lane.b32.xlu0 %v1645, 28
        %v1690 = vpop.permute.xlu0 %1689
        %1691 = vrot.lane.b32.xlu0 %v1559, 28
        %v1692 = vpop.permute.xlu0 %1691
        %1693 = vrot.lane.b32.xlu0 %v1646, 28
        %v1694 = vpop.permute.xlu0 %1693
        %1695 = vrot.lane.b32.xlu0 %v1647, 28
        %v1696 = vpop.permute.xlu0 %1695
        %1697 = vrot.lane.b32.xlu0 %v1648, 28
        %v1698 = vpop.permute.xlu0 %1697
        %1699 = vrot.lane.b32.xlu0 %v1548, 28
        %v1700 = vpop.permute.xlu0 %1699
        %1701 = vrot.lane.b32.xlu0 %v1635, 28
        %v1702 = vpop.permute.xlu0 %1701
        %1703 = vrot.lane.b32.xlu0 %v1636, 28
        %v1704 = vpop.permute.xlu0 %1703
        %1705 = vrot.lane.b32.xlu0 %v1634, 28
        %v1706 = vpop.permute.xlu0 %1705
        %v1707 = vsel %vm597, %v1668, %v1670
        %v1708 = vsel %vm597, %v1670, %v1672
        %v1709 = vsel %vm597, %v1672, %v1674
        %v1710 = vsel %vm597, %v1676, %v1678
        %v1711 = vsel %vm597, %v1678, %v1680
        %v1712 = vsel %vm597, %v1680, %v1682
        %v1713 = vsel %vm597, %v1684, %v1686
        %v1714 = vsel %vm597, %v1686, %v1688
        %v1715 = vsel %vm597, %v1688, %v1690
        %v1716 = vsel %vm597, %v1692, %v1694
        %v1717 = vsel %vm597, %v1694, %v1696
        %v1718 = vsel %vm597, %v1696, %v1698
        %v1719 = vsel %vm597, %v1700, %v1702
        %v1720 = vsel %vm597, %v1702, %v1704
        %v1721 = vsel %vm597, %v1704, %v1706
        %v1735 = vsel %vm634, %v1650, 0
        %v1737 = vsel %vm458, %v1719, 0
        %v1739 = vsel %vm458, %v1720, 0
        %v1741 = vsel %vm458, %v1721, 0
        %1743 = vmatprep.subr.mxu0 %v1708
        %1744 = vmatpush1.msra.mxu0 %v1707
        %1745 = vmatprep.subr.mxu0 %v1711
        %1746 = vmatpush1.msra.mxu0 %v1710
        %1747 = vmatprep.subr.mxu0 %v1714
        %1748 = vmatpush1.msra.mxu0 %v1713
        %1749 = vmatprep.subr.mxu0 %v1717
        %1750 = vmatpush1.msra.mxu0 %v1716
        %1751 = vmatprep.subr.mxu0 %v1739
        %1752 = vmatpush1.msra.mxu0 %v1737
        %1753 = vmatprep.subr.mxu0 0.0
        %1754 = vmatpush1.msra.mxu0 0.0
        %1755 = vmatprep.subr.mxu0 0.0
        %1756 = vmatpush1.msra.mxu0 0.0
        %1757 = vmatprep.subr.mxu0 0.0
        %1758 = vmatpush1.msra.mxu0 0.0
        %1759 = vmatprep.subr.mxu0 0.0
        %1760 = vmatpush1.msra.mxu0 0.0
        %1761 = vmatprep.subr.mxu0 0.0
        %1762 = vmatpush1.msra.mxu0 0.0
        %1763 = vmatprep.subr.mxu0 0.0
        %1764 = vmatpush1.msra.mxu0 0.0
        %1765 = vmatprep.subr.mxu0 0.0
        %1766 = vmatpush1.msra.mxu0 0.0
        %1767 = vmatprep.subr.mxu0 0.0
        %1768 = vmatpush1.msra.mxu0 0.0
        %1769 = vmatprep.subr.mxu0 0.0
        %1770 = vmatpush1.msra.mxu0 0.0
        %1771 = vmatprep.subr.mxu0 0.0
        %1772 = vmatpush1.msra.mxu0 0.0
        %1773 = vmatprep.subr.mxu0 0.0
        %1774 = vmatpush1.msra.mxu0 0.0
        %1775 = vmatprep.subr.mxu0 0.0
        %1776 = vmatpush1.msra.mxu0 0.0
        %1777 = vmatprep.subr.mxu0 0.0
        %1778 = vmatpush1.msra.mxu0 0.0
        %1779 = vmatprep.subr.mxu0 0.0
        %1780 = vmatpush1.msra.mxu0 0.0
        %1781 = vmatprep.subr.mxu0 0.0
        %1782 = vmatpush1.msra.mxu0 0.0
        %1783 = vmatprep.subr.mxu0 0.0
        %1784 = vmatpush1.msra.mxu0 0.0
        %1785 = vmatprep.subr.mxu0 0.0
        %1786 = vmatpush1.msra.mxu0 0.0
        %1787 = vmatprep.subr.mxu0 0.0
        %1788 = vmatpush1.msra.mxu0 0.0
        %1789 = vmatprep.subr.mxu0 0.0
        %1790 = vmatpush1.msra.mxu0 0.0
        %1791 = vmatprep.subr.mxu0 0.0
        %1792 = vmatpush1.msra.mxu0 0.0
        %1793 = vmatprep.subr.mxu0 0.0
        %1794 = vmatpush1.msra.mxu0 0.0
        %1795 = vmatprep.subr.mxu0 0.0
        %1796 = vmatpush1.msra.mxu0 0.0
        %1797 = vmatprep.subr.mxu0 0.0
        %1798 = vmatpush1.msra.mxu0 0.0
        %1799 = vmatprep.subr.mxu0 0.0
        %1800 = vmatpush1.msra.mxu0 0.0
        %1801 = vmatprep.subr.mxu0 0.0
        %1802 = vmatpush1.msra.mxu0 0.0
        %1803 = vmatprep.subr.mxu0 0.0
        %1804 = vmatpush1.msra.mxu0 0.0
        %1805 = vmatprep.subr.mxu0 0.0
        %1806 = vmatpush1.msra.mxu0 0.0
        %1807 = vmatprep.mubr.f32.mxu0 0.0
        %1808 = vmatmul.mubr.f32.gmra.mrb[0].mxu0 %v1735
        %v1809 = vpop.f32.mrb[0].mxu0
        %v1810 = vadd.f32 0.0, %v1809
        %v1811 = vpop.f32.mrb[0].mxu0
        %v1812 = vadd.f32 0.0, %v1811
        %1813 = vdwg.mxu0
        %1814 = vmatprep.subr.mxu0 0.0
        %1815 = vmatpush1.msra.mxu0 %v1709
        %1816 = vmatprep.subr.mxu0 0.0
        %1817 = vmatpush1.msra.mxu0 %v1712
        %1818 = vmatprep.subr.mxu0 0.0
        %1819 = vmatpush1.msra.mxu0 %v1715
        %1820 = vmatprep.subr.mxu0 0.0
        %1821 = vmatpush1.msra.mxu0 %v1718
        %1822 = vmatprep.subr.mxu0 0.0
        %1823 = vmatpush1.msra.mxu0 %v1741
        %1824 = vmatprep.subr.mxu0 0.0
        %1825 = vmatpush1.msra.mxu0 0.0
        %1826 = vmatprep.subr.mxu0 0.0
        %1827 = vmatpush1.msra.mxu0 0.0
        %1828 = vmatprep.subr.mxu0 0.0
        %1829 = vmatpush1.msra.mxu0 0.0
        %1830 = vmatprep.subr.mxu0 0.0
        %1831 = vmatpush1.msra.mxu0 0.0
        %1832 = vmatprep.subr.mxu0 0.0
        %1833 = vmatpush1.msra.mxu0 0.0
        %1834 = vmatprep.subr.mxu0 0.0
        %1835 = vmatpush1.msra.mxu0 0.0
        %1836 = vmatprep.subr.mxu0 0.0
        %1837 = vmatpush1.msra.mxu0 0.0
        %1838 = vmatprep.subr.mxu0 0.0
        %1839 = vmatpush1.msra.mxu0 0.0
        %1840 = vmatprep.subr.mxu0 0.0
        %1841 = vmatpush1.msra.mxu0 0.0
        %1842 = vmatprep.subr.mxu0 0.0
        %1843 = vmatpush1.msra.mxu0 0.0
        %1844 = vmatprep.subr.mxu0 0.0
        %1845 = vmatpush1.msra.mxu0 0.0
        %1846 = vmatprep.subr.mxu0 0.0
        %1847 = vmatpush1.msra.mxu0 0.0
        %1848 = vmatprep.subr.mxu0 0.0
        %1849 = vmatpush1.msra.mxu0 0.0
        %1850 = vmatprep.subr.mxu0 0.0
        %1851 = vmatpush1.msra.mxu0 0.0
        %1852 = vmatprep.subr.mxu0 0.0
        %1853 = vmatpush1.msra.mxu0 0.0
        %1854 = vmatprep.subr.mxu0 0.0
        %1855 = vmatpush1.msra.mxu0 0.0
        %1856 = vmatprep.subr.mxu0 0.0
        %1857 = vmatpush1.msra.mxu0 0.0
        %1858 = vmatprep.subr.mxu0 0.0
        %1859 = vmatpush1.msra.mxu0 0.0
        %1860 = vmatprep.subr.mxu0 0.0
        %1861 = vmatpush1.msra.mxu0 0.0
        %1862 = vmatprep.subr.mxu0 0.0
        %1863 = vmatpush1.msra.mxu0 0.0
        %1864 = vmatprep.subr.mxu0 0.0
        %1865 = vmatpush1.msra.mxu0 0.0
        %1866 = vmatprep.subr.mxu0 0.0
        %1867 = vmatpush1.msra.mxu0 0.0
        %1868 = vmatprep.subr.mxu0 0.0
        %1869 = vmatpush1.msra.mxu0 0.0
        %1870 = vmatprep.subr.mxu0 0.0
        %1871 = vmatpush1.msra.mxu0 0.0
        %1872 = vmatprep.subr.mxu0 0.0
        %1873 = vmatpush1.msra.mxu0 0.0
        %1874 = vmatprep.subr.mxu0 0.0
        %1875 = vmatpush1.msra.mxu0 0.0
        %1876 = vmatprep.subr.mxu0 0.0
        %1877 = vmatpush1.msra.mxu0 0.0
        %1878 = vmatprep.mubr.f32.mxu0 0.0
        %1879 = vmatmul.mubr.f32.gmra.mrb[0].mxu0 %v1735
        %v1880 = vpop.f32.mrb[0].mxu0
        %v1881 = vadd.f32 0.0, %v1880
        %v1882 = vpop.f32.mrb[0].mxu0
        %1883 = vdwg.mxu0
        %v1885 = vsel %vm634, %v1562, 0
        %v1887 = vsel %vm458, %v1548, 0
        %v1889 = vsel %vm458, %v1549, 0
        %v1891 = vsel %vm458, %v1547, 0
        %1893 = vmatprep.subr.mxu0 %v1551
        %1894 = vmatpush1.msra.mxu0 %v1550
        %1895 = vmatprep.subr.mxu0 %v1554
        %1896 = vmatpush1.msra.mxu0 %v1553
        %1897 = vmatprep.subr.mxu0 %v1557
        %1898 = vmatpush1.msra.mxu0 %v1556
        %1899 = vmatprep.subr.mxu0 %v1560
        %1900 = vmatpush1.msra.mxu0 %v1559
        %1901 = vmatprep.subr.mxu0 %v1889
        %1902 = vmatpush1.msra.mxu0 %v1887
        %1903 = vmatprep.subr.mxu0 0.0
        %1904 = vmatpush1.msra.mxu0 0.0
        %1905 = vmatprep.subr.mxu0 0.0
        %1906 = vmatpush1.msra.mxu0 0.0
        %1907 = vmatprep.subr.mxu0 0.0
        %1908 = vmatpush1.msra.mxu0 0.0
        %1909 = vmatprep.subr.mxu0 0.0
        %1910 = vmatpush1.msra.mxu0 0.0
        %1911 = vmatprep.subr.mxu0 0.0
        %1912 = vmatpush1.msra.mxu0 0.0
        %1913 = vmatprep.subr.mxu0 0.0
        %1914 = vmatpush1.msra.mxu0 0.0
        %1915 = vmatprep.subr.mxu0 0.0
        %1916 = vmatpush1.msra.mxu0 0.0
        %1917 = vmatprep.subr.mxu0 0.0
        %1918 = vmatpush1.msra.mxu0 0.0
        %1919 = vmatprep.subr.mxu0 0.0
        %1920 = vmatpush1.msra.mxu0 0.0
        %1921 = vmatprep.subr.mxu0 0.0
        %1922 = vmatpush1.msra.mxu0 0.0
        %1923 = vmatprep.subr.mxu0 0.0
        %1924 = vmatpush1.msra.mxu0 0.0
        %1925 = vmatprep.subr.mxu0 0.0
        %1926 = vmatpush1.msra.mxu0 0.0
        %1927 = vmatprep.subr.mxu0 0.0
        %1928 = vmatpush1.msra.mxu0 0.0
        %1929 = vmatprep.subr.mxu0 0.0
        %1930 = vmatpush1.msra.mxu0 0.0
        %1931 = vmatprep.subr.mxu0 0.0
        %1932 = vmatpush1.msra.mxu0 0.0
        %1933 = vmatprep.subr.mxu0 0.0
        %1934 = vmatpush1.msra.mxu0 0.0
        %1935 = vmatprep.subr.mxu0 0.0
        %1936 = vmatpush1.msra.mxu0 0.0
        %1937 = vmatprep.subr.mxu0 0.0
        %1938 = vmatpush1.msra.mxu0 0.0
        %1939 = vmatprep.subr.mxu0 0.0
        %1940 = vmatpush1.msra.mxu0 0.0
        %1941 = vmatprep.subr.mxu0 0.0
        %1942 = vmatpush1.msra.mxu0 0.0
        %1943 = vmatprep.subr.mxu0 0.0
        %1944 = vmatpush1.msra.mxu0 0.0
        %1945 = vmatprep.subr.mxu0 0.0
        %1946 = vmatpush1.msra.mxu0 0.0
        %1947 = vmatprep.subr.mxu0 0.0
        %1948 = vmatpush1.msra.mxu0 0.0
        %1949 = vmatprep.subr.mxu0 0.0
        %1950 = vmatpush1.msra.mxu0 0.0
        %1951 = vmatprep.subr.mxu0 0.0
        %1952 = vmatpush1.msra.mxu0 0.0
        %1953 = vmatprep.subr.mxu0 0.0
        %1954 = vmatpush1.msra.mxu0 0.0
        %1955 = vmatprep.subr.mxu0 0.0
        %1956 = vmatpush1.msra.mxu0 0.0
        %1957 = vmatprep.mubr.f32.mxu0 0.0
        %1958 = vmatmul.mubr.f32.gmra.mrb[0].mxu0 %v1885
        %v1959 = vpop.f32.mrb[0].mxu0
        %v1960 = vadd.f32 %v1810, %v1959
        %v1961 = vpop.f32.mrb[0].mxu0
        %v1962 = vadd.f32 %v1812, %v1961
        %1963 = vdwg.mxu0
        %1964 = vmatprep.subr.mxu0 0.0
        %1965 = vmatpush1.msra.mxu0 %v1552
        %1966 = vmatprep.subr.mxu0 0.0
        %1967 = vmatpush1.msra.mxu0 %v1555
        %1968 = vmatprep.subr.mxu0 0.0
        %1969 = vmatpush1.msra.mxu0 %v1558
        %1970 = vmatprep.subr.mxu0 0.0
        %1971 = vmatpush1.msra.mxu0 %v1561
        %1972 = vmatprep.subr.mxu0 0.0
        %1973 = vmatpush1.msra.mxu0 %v1891
        %1974 = vmatprep.subr.mxu0 0.0
        %1975 = vmatpush1.msra.mxu0 0.0
        %1976 = vmatprep.subr.mxu0 0.0
        %1977 = vmatpush1.msra.mxu0 0.0
        %1978 = vmatprep.subr.mxu0 0.0
        %1979 = vmatpush1.msra.mxu0 0.0
        %1980 = vmatprep.subr.mxu0 0.0
        %1981 = vmatpush1.msra.mxu0 0.0
        %1982 = vmatprep.subr.mxu0 0.0
        %1983 = vmatpush1.msra.mxu0 0.0
        %1984 = vmatprep.subr.mxu0 0.0
        %1985 = vmatpush1.msra.mxu0 0.0
        %1986 = vmatprep.subr.mxu0 0.0
        %1987 = vmatpush1.msra.mxu0 0.0
        %1988 = vmatprep.subr.mxu0 0.0
        %1989 = vmatpush1.msra.mxu0 0.0
        %1990 = vmatprep.subr.mxu0 0.0
        %1991 = vmatpush1.msra.mxu0 0.0
        %1992 = vmatprep.subr.mxu0 0.0
        %1993 = vmatpush1.msra.mxu0 0.0
        %1994 = vmatprep.subr.mxu0 0.0
        %1995 = vmatpush1.msra.mxu0 0.0
        %1996 = vmatprep.subr.mxu0 0.0
        %1997 = vmatpush1.msra.mxu0 0.0
        %1998 = vmatprep.subr.mxu0 0.0
        %1999 = vmatpush1.msra.mxu0 0.0
        %2000 = vmatprep.subr.mxu0 0.0
        %2001 = vmatpush1.msra.mxu0 0.0
        %2002 = vmatprep.subr.mxu0 0.0
        %2003 = vmatpush1.msra.mxu0 0.0
        %2004 = vmatprep.subr.mxu0 0.0
        %2005 = vmatpush1.msra.mxu0 0.0
        %2006 = vmatprep.subr.mxu0 0.0
        %2007 = vmatpush1.msra.mxu0 0.0
        %2008 = vmatprep.subr.mxu0 0.0
        %2009 = vmatpush1.msra.mxu0 0.0
        %2010 = vmatprep.subr.mxu0 0.0
        %2011 = vmatpush1.msra.mxu0 0.0
        %2012 = vmatprep.subr.mxu0 0.0
        %2013 = vmatpush1.msra.mxu0 0.0
        %2014 = vmatprep.subr.mxu0 0.0
        %2015 = vmatpush1.msra.mxu0 0.0
        %2016 = vmatprep.subr.mxu0 0.0
        %2017 = vmatpush1.msra.mxu0 0.0
        %2018 = vmatprep.subr.mxu0 0.0
        %2019 = vmatpush1.msra.mxu0 0.0
        %2020 = vmatprep.subr.mxu0 0.0
        %2021 = vmatpush1.msra.mxu0 0.0
        %2022 = vmatprep.subr.mxu0 0.0
        %2023 = vmatpush1.msra.mxu0 0.0
        %2024 = vmatprep.subr.mxu0 0.0
        %2025 = vmatpush1.msra.mxu0 0.0
        %2026 = vmatprep.subr.mxu0 0.0
        %2027 = vmatpush1.msra.mxu0 0.0
        %2028 = vmatprep.mubr.f32.mxu0 0.0
        %2029 = vmatmul.mubr.f32.gmra.mrb[0].mxu0 %v1885
        %v2030 = vpop.f32.mrb[0].mxu0
        %v2031 = vadd.f32 %v1881, %v2030
        %v2032 = vpop.f32.mrb[0].mxu0
        %2033 = vdwg.mxu0
        %v2034 = vld [vmem:[#allocation2 + $0x4] sm:$0xff]
        %v2035 = vld [vmem:[#allocation2 + $0xc] sm:$0xf]
        %v2036 = vld [vmem:[#allocation2 + $0x4] sm:$0xff]
        %v2037 = vld [vmem:[#allocation2 + $0xc] sm:$0xff]
        %v2040 = vcombine.high %v2034, %v2034
        %v2042 = vcombine.low %v2034, %v2034
        %v2043 = vcombine.low %v2035, %v2035
        %2044 = vrot.lane.b32.xlu0 %v2042, 127
        %v2045 = vpop.permute.xlu0 %2044
        %2046 = vrot.lane.b32.xlu0 %v2034, 127
        %v2047 = vpop.permute.xlu0 %2046
        %2048 = vrot.lane.b32.xlu0 %v2043, 127
        %v2049 = vpop.permute.xlu0 %2048
        %v2050 = vsel %vm342, %v2045, %v2047
        %v2051 = vsel %vm342, %v2047, %v2049
        %2055 = vrot.lane.b32.xlu0 %v2034, 126
        %v2056 = vpop.permute.xlu0 %2055
        %2057 = vrot.lane.b32.xlu0 %v2040, 126
        %v2058 = vpop.permute.xlu0 %2057
        %2059 = vrot.lane.b32.xlu0 %v2035, 126
        %v2060 = vpop.permute.xlu0 %2059
        %v2061 = vsel %vm358, %v2056, %v2058
        %v2062 = vsel %vm358, %v2058, %v2060
        %2066 = vrot.lane.b32.xlu0 %v2042, 118
        %v2067 = vpop.permute.xlu0 %2066
        %2068 = vrot.lane.b32.xlu0 %v2034, 118
        %v2069 = vpop.permute.xlu0 %2068
        %2070 = vrot.lane.b32.xlu0 %v2043, 118
        %v2071 = vpop.permute.xlu0 %2070
        %v2072 = vsel %vm374, %v2067, %v2069
        %v2073 = vsel %vm374, %v2069, %v2071
        %2077 = vrot.lane.b32.xlu0 %v2034, 117
        %v2078 = vpop.permute.xlu0 %2077
        %2079 = vrot.lane.b32.xlu0 %v2040, 117
        %v2080 = vpop.permute.xlu0 %2079
        %2081 = vrot.lane.b32.xlu0 %v2035, 117
        %v2082 = vpop.permute.xlu0 %2081
        %v2083 = vsel %vm390, %v2078, %v2080
        %v2084 = vsel %vm390, %v2080, %v2082
        %2088 = vrot.lane.b32.xlu0 %v2042, 116
        %v2089 = vpop.permute.xlu0 %2088
        %2090 = vrot.lane.b32.xlu0 %v2034, 116
        %v2091 = vpop.permute.xlu0 %2090
        %2092 = vrot.lane.b32.xlu0 %v2043, 116
        %v2093 = vpop.permute.xlu0 %2092
        %v2094 = vsel %vm406, %v2089, %v2091
        %v2095 = vsel %vm406, %v2091, %v2093
        %v2101 = vcombine.high %v2036, %v2036
        %v2102 = vcombine.high %v2037, %v2037
        %2103 = vrot.lane.b32.xlu0 %v2036, 108
        %v2104 = vpop.permute.xlu0 %2103
        %2105 = vrot.lane.b32.xlu0 %v2101, 108
        %v2106 = vpop.permute.xlu0 %2105
        %2107 = vrot.lane.b32.xlu0 %v2037, 108
        %v2108 = vpop.permute.xlu0 %2107
        %2109 = vrot.lane.b32.xlu0 %v2102, 108
        %v2110 = vpop.permute.xlu0 %2109
        %v2111 = vsel %vm422, %v2104, %v2106
        %v2112 = vsel %vm422, %v2106, %v2108
        %v2113 = vsel %vm422, %v2108, %v2110
        %v2117 = vcombine.low %v2036, %v2036
        %v2118 = vcombine.low %v2037, %v2037
        %2119 = vrot.lane.b32.xlu0 %v2117, 107
        %v2120 = vpop.permute.xlu0 %2119
        %2121 = vrot.lane.b32.xlu0 %v2036, 107
        %v2122 = vpop.permute.xlu0 %2121
        %2123 = vrot.lane.b32.xlu0 %v2118, 107
        %v2124 = vpop.permute.xlu0 %2123
        %2125 = vrot.lane.b32.xlu0 %v2037, 107
        %v2126 = vpop.permute.xlu0 %2125
        %v2127 = vsel %vm438, %v2120, %v2122
        %v2128 = vsel %vm438, %v2122, %v2124
        %v2129 = vsel %vm438, %v2124, %v2126
        %2133 = vrot.lane.b32.xlu0 %v2036, 106
        %v2134 = vpop.permute.xlu0 %2133
        %2135 = vrot.lane.b32.xlu0 %v2101, 106
        %v2136 = vpop.permute.xlu0 %2135
        %2137 = vrot.lane.b32.xlu0 %v2037, 106
        %v2138 = vpop.permute.xlu0 %2137
        %2139 = vrot.lane.b32.xlu0 %v2102, 106
        %v2140 = vpop.permute.xlu0 %2139
        %v2141 = vsel %vm454, %v2134, %v2136
        %v2142 = vsel %vm454, %v2136, %v2138
        %v2143 = vsel %vm454, %v2138, %v2140
        %v2144 = vsel %vm458, %v2034, %v2050
        %v2145 = vsel %vm458, %v2040, %v2051
        %v2146 = vsel %vm458, %v2035, %v2049
        %v2147 = vsel %vm458, %v2061, %v2072
        %v2148 = vsel %vm458, %v2062, %v2073
        %v2149 = vsel %vm458, %v2060, %v2071
        %v2150 = vsel %vm458, %v2083, %v2094
        %v2151 = vsel %vm458, %v2084, %v2095
        %v2152 = vsel %vm458, %v2082, %v2093
        %v2153 = vsel %vm458, %v2111, %v2127
        %v2154 = vsel %vm458, %v2112, %v2128
        %v2155 = vsel %vm458, %v2113, %v2129
        %s2156 = scalar_lea.vmem %s4, 8
        %v2157 = vld [vmem:[%s2156] sm:$0xf]
        %2170 = vrot.lane.b32.xlu0 %v2144, 56
        %v2171 = vpop.permute.xlu0 %2170
        %2172 = vrot.lane.b32.xlu0 %v2145, 56
        %v2173 = vpop.permute.xlu0 %2172
        %2174 = vrot.lane.b32.xlu0 %v2146, 56
        %v2175 = vpop.permute.xlu0 %2174
        %2176 = vrot.lane.b32.xlu0 %v2147, 56
        %v2177 = vpop.permute.xlu0 %2176
        %2178 = vrot.lane.b32.xlu0 %v2148, 56
        %v2179 = vpop.permute.xlu0 %2178
        %2180 = vrot.lane.b32.xlu0 %v2149, 56
        %v2181 = vpop.permute.xlu0 %2180
        %2182 = vrot.lane.b32.xlu0 %v2150, 56
        %v2183 = vpop.permute.xlu0 %2182
        %2184 = vrot.lane.b32.xlu0 %v2151, 56
        %v2185 = vpop.permute.xlu0 %2184
        %2186 = vrot.lane.b32.xlu0 %v2152, 56
        %v2187 = vpop.permute.xlu0 %2186
        %2188 = vrot.lane.b32.xlu0 %v2153, 56
        %v2189 = vpop.permute.xlu0 %2188
        %2190 = vrot.lane.b32.xlu0 %v2154, 56
        %v2191 = vpop.permute.xlu0 %2190
        %2192 = vrot.lane.b32.xlu0 %v2155, 56
        %v2193 = vpop.permute.xlu0 %2192
        %2194 = vrot.lane.b32.xlu0 %v2141, 56
        %v2195 = vpop.permute.xlu0 %2194
        %2196 = vrot.lane.b32.xlu0 %v2142, 56
        %v2197 = vpop.permute.xlu0 %2196
        %2198 = vrot.lane.b32.xlu0 %v2143, 56
        %v2199 = vpop.permute.xlu0 %2198
        %v2200 = vsel %vm1193, %v2171, %v2173
        %v2201 = vsel %vm1193, %v2173, %v2175
        %v2202 = vsel %vm1193, %v2177, %v2179
        %v2203 = vsel %vm1193, %v2179, %v2181
        %v2204 = vsel %vm1193, %v2183, %v2185
        %v2205 = vsel %vm1193, %v2185, %v2187
        %v2206 = vsel %vm1193, %v2189, %v2191
        %v2207 = vsel %vm1193, %v2191, %v2193
        %v2208 = vsel %vm1193, %v2195, %v2197
        %v2209 = vsel %vm1193, %v2197, %v2199
        %v2223 = vsel %vm634, %v2157, 0
        %v2225 = vsel %vm458, %v2208, 0
        %v2227 = vsel %vm458, %v2209, 0
        %v2229 = vsel %vm458, %v2199, 0
        %2231 = vmatprep.subr.mxu0 %v2201
        %2232 = vmatpush1.msra.mxu0 %v2200
        %2233 = vmatprep.subr.mxu0 %v2203
        %2234 = vmatpush1.msra.mxu0 %v2202
        %2235 = vmatprep.subr.mxu0 %v2205
        %2236 = vmatpush1.msra.mxu0 %v2204
        %2237 = vmatprep.subr.mxu0 %v2207
        %2238 = vmatpush1.msra.mxu0 %v2206
        %2239 = vmatprep.subr.mxu0 %v2227
        %2240 = vmatpush1.msra.mxu0 %v2225
        %2241 = vmatprep.subr.mxu0 0.0
        %2242 = vmatpush1.msra.mxu0 0.0
        %2243 = vmatprep.subr.mxu0 0.0
        %2244 = vmatpush1.msra.mxu0 0.0
        %2245 = vmatprep.subr.mxu0 0.0
        %2246 = vmatpush1.msra.mxu0 0.0
        %2247 = vmatprep.subr.mxu0 0.0
        %2248 = vmatpush1.msra.mxu0 0.0
        %2249 = vmatprep.subr.mxu0 0.0
        %2250 = vmatpush1.msra.mxu0 0.0
        %2251 = vmatprep.subr.mxu0 0.0
        %2252 = vmatpush1.msra.mxu0 0.0
        %2253 = vmatprep.subr.mxu0 0.0
        %2254 = vmatpush1.msra.mxu0 0.0
        %2255 = vmatprep.subr.mxu0 0.0
        %2256 = vmatpush1.msra.mxu0 0.0
        %2257 = vmatprep.subr.mxu0 0.0
        %2258 = vmatpush1.msra.mxu0 0.0
        %2259 = vmatprep.subr.mxu0 0.0
        %2260 = vmatpush1.msra.mxu0 0.0
        %2261 = vmatprep.subr.mxu0 0.0
        %2262 = vmatpush1.msra.mxu0 0.0
        %2263 = vmatprep.subr.mxu0 0.0
        %2264 = vmatpush1.msra.mxu0 0.0
        %2265 = vmatprep.subr.mxu0 0.0
        %2266 = vmatpush1.msra.mxu0 0.0
        %2267 = vmatprep.subr.mxu0 0.0
        %2268 = vmatpush1.msra.mxu0 0.0
        %2269 = vmatprep.subr.mxu0 0.0
        %2270 = vmatpush1.msra.mxu0 0.0
        %2271 = vmatprep.subr.mxu0 0.0
        %2272 = vmatpush1.msra.mxu0 0.0
        %2273 = vmatprep.subr.mxu0 0.0
        %2274 = vmatpush1.msra.mxu0 0.0
        %2275 = vmatprep.subr.mxu0 0.0
        %2276 = vmatpush1.msra.mxu0 0.0
        %2277 = vmatprep.subr.mxu0 0.0
        %2278 = vmatpush1.msra.mxu0 0.0
        %2279 = vmatprep.subr.mxu0 0.0
        %2280 = vmatpush1.msra.mxu0 0.0
        %2281 = vmatprep.subr.mxu0 0.0
        %2282 = vmatpush1.msra.mxu0 0.0
        %2283 = vmatprep.subr.mxu0 0.0
        %2284 = vmatpush1.msra.mxu0 0.0
        %2285 = vmatprep.subr.mxu0 0.0
        %2286 = vmatpush1.msra.mxu0 0.0
        %2287 = vmatprep.subr.mxu0 0.0
        %2288 = vmatpush1.msra.mxu0 0.0
        %2289 = vmatprep.subr.mxu0 0.0
        %2290 = vmatpush1.msra.mxu0 0.0
        %2291 = vmatprep.subr.mxu0 0.0
        %2292 = vmatpush1.msra.mxu0 0.0
        %2293 = vmatprep.subr.mxu0 0.0
        %2294 = vmatpush1.msra.mxu0 0.0
        %2295 = vmatprep.mubr.f32.mxu0 0.0
        %2296 = vmatmul.mubr.f32.gmra.mrb[0].mxu0 %v2223
        %v2297 = vpop.f32.mrb[0].mxu0
        %v2298 = vadd.f32 0.0, %v2297
        %v2299 = vpop.f32.mrb[0].mxu0
        %v2300 = vadd.f32 0.0, %v2299
        %2301 = vdwg.mxu0
        %2302 = vmatprep.subr.mxu0 0.0
        %2303 = vmatpush1.msra.mxu0 %v2175
        %2304 = vmatprep.subr.mxu0 0.0
        %2305 = vmatpush1.msra.mxu0 %v2181
        %2306 = vmatprep.subr.mxu0 0.0
        %2307 = vmatpush1.msra.mxu0 %v2187
        %2308 = vmatprep.subr.mxu0 0.0
        %2309 = vmatpush1.msra.mxu0 %v2193
        %2310 = vmatprep.subr.mxu0 0.0
        %2311 = vmatpush1.msra.mxu0 %v2229
        %2312 = vmatprep.subr.mxu0 0.0
        %2313 = vmatpush1.msra.mxu0 0.0
        %2314 = vmatprep.subr.mxu0 0.0
        %2315 = vmatpush1.msra.mxu0 0.0
        %2316 = vmatprep.subr.mxu0 0.0
        %2317 = vmatpush1.msra.mxu0 0.0
        %2318 = vmatprep.subr.mxu0 0.0
        %2319 = vmatpush1.msra.mxu0 0.0
        %2320 = vmatprep.subr.mxu0 0.0
        %2321 = vmatpush1.msra.mxu0 0.0
        %2322 = vmatprep.subr.mxu0 0.0
        %2323 = vmatpush1.msra.mxu0 0.0
        %2324 = vmatprep.subr.mxu0 0.0
        %2325 = vmatpush1.msra.mxu0 0.0
        %2326 = vmatprep.subr.mxu0 0.0
        %2327 = vmatpush1.msra.mxu0 0.0
        %2328 = vmatprep.subr.mxu0 0.0
        %2329 = vmatpush1.msra.mxu0 0.0
        %2330 = vmatprep.subr.mxu0 0.0
        %2331 = vmatpush1.msra.mxu0 0.0
        %2332 = vmatprep.subr.mxu0 0.0
        %2333 = vmatpush1.msra.mxu0 0.0
        %2334 = vmatprep.subr.mxu0 0.0
        %2335 = vmatpush1.msra.mxu0 0.0
        %2336 = vmatprep.subr.mxu0 0.0
        %2337 = vmatpush1.msra.mxu0 0.0
        %2338 = vmatprep.subr.mxu0 0.0
        %2339 = vmatpush1.msra.mxu0 0.0
        %2340 = vmatprep.subr.mxu0 0.0
        %2341 = vmatpush1.msra.mxu0 0.0
        %2342 = vmatprep.subr.mxu0 0.0
        %2343 = vmatpush1.msra.mxu0 0.0
        %2344 = vmatprep.subr.mxu0 0.0
        %2345 = vmatpush1.msra.mxu0 0.0
        %2346 = vmatprep.subr.mxu0 0.0
        %2347 = vmatpush1.msra.mxu0 0.0
        %2348 = vmatprep.subr.mxu0 0.0
        %2349 = vmatpush1.msra.mxu0 0.0
        %2350 = vmatprep.subr.mxu0 0.0
        %2351 = vmatpush1.msra.mxu0 0.0
        %2352 = vmatprep.subr.mxu0 0.0
        %2353 = vmatpush1.msra.mxu0 0.0
        %2354 = vmatprep.subr.mxu0 0.0
        %2355 = vmatpush1.msra.mxu0 0.0
        %2356 = vmatprep.subr.mxu0 0.0
        %2357 = vmatpush1.msra.mxu0 0.0
        %2358 = vmatprep.subr.mxu0 0.0
        %2359 = vmatpush1.msra.mxu0 0.0
        %2360 = vmatprep.subr.mxu0 0.0
        %2361 = vmatpush1.msra.mxu0 0.0
        %2362 = vmatprep.subr.mxu0 0.0
        %2363 = vmatpush1.msra.mxu0 0.0
        %2364 = vmatprep.subr.mxu0 0.0
        %2365 = vmatpush1.msra.mxu0 0.0
        %2366 = vmatprep.mubr.f32.mxu0 0.0
        %2367 = vmatmul.mubr.f32.gmra.mrb[0].mxu0 %v2223
        %v2368 = vpop.f32.mrb[0].mxu0
        %v2369 = vadd.f32 0.0, %v2368
        %v2370 = vpop.f32.mrb[0].mxu0
        %2371 = vdwg.mxu0
        %v2372 = vadd.f32 %v1960, %v2298
        %v2373 = vadd.f32 %v1962, %v2300
        %v2374 = vadd.f32 %v2031, %v2369
        %v2375 = vld [vmem:[%s290 + $0x4] sm:$0xff]
        %v2376 = vld [vmem:[%s290 + $0xc] sm:$0xf]
        %v2377 = vld [vmem:[%s5] sm:$0xf]
        %2379 = vset.pattern.permute.xlu0 0
        %2380 = vperm.xlu0 %2379, %v2377
        %v2381 = vpop.permute.xlu0 %2380
        %v2383 = vadd.f32 %v2372, %v2381
        %v2384 = vadd.f32 %v2373, %v2381
        %v2385 = vadd.f32 %v2374, %v2381
        %v2388 = vcombine.high %v2375, %v2375
        %2389 = vrot.lane.b32.xlu0 %v2375, 45
        %v2390 = vpop.permute.xlu0 %2389
        %2391 = vrot.lane.b32.xlu0 %v2388, 45
        %v2392 = vpop.permute.xlu0 %2391
        %2393 = vrot.lane.b32.xlu0 %v2376, 45
        %v2394 = vpop.permute.xlu0 %2393
        %vm2395 = vcmask 367616
        %v2396 = vsel %vm2395, %v2390, %v2392
        %v2397 = vsel %vm2395, %v2392, %v2394
        %v2401 = vadd.f32 %v2383, %v2396
        %v2402 = vadd.f32 %v2384, %v2397
        %v2403 = vadd.f32 %v2385, %v2394
        %v2404 = vmax.f32 %v2401, 0.0
        %v2405 = vmax.f32 %v2402, 0.0
        %v2406 = vmax.f32 %v2403, 0.0
        %v2409 = vcombine.low %v2404, %v2405
        %2411 = vst [vmem:[%s323] sm:$0xff] %v2409
        %vm2412 = vcmask 355328
        %2413 = vst.msk [vmem:[%s323 + $0x8] sm:$0xf] %vm2412, %v2406
        %s2414 = sand.u32 %s186, 1
        %s2415 = scalar_lea.sflag [#allocation5], %s2414
        %s2416 = sand.u32 %s186, 1
        %s2417 = smul.addr %s2416, 12
        %s2418 = scalar_lea.vmem [#allocation8], %s2417
        // Predicated region
        $region53: #{tpu_custom_call.1} parent=43 // pred_check
          %p2419 = pneg %p196
        $region54: #{tpu_custom_call.1} parent=43 // pred_check_branch
          %2421 = sbr.rel (%p2419) target = $region56
        $region55: #{tpu_custom_call.1} parent=43 // pred_region
          %s2423 = ssub.s32 192, 192
          %2424 = vsyncadd %s2415, %s2423
          %s2425 = smul.addr %s31, 3
          %s2426 = smul.addr %s30, 9
          %s2427 = sadd.s32 %s2425, %s2426
          %s2428 = smul.addr %s2427, 64
          %s2429 = scalar_lea.hbm %s6, %s2428
          %s2431 = sshll.u32 %s2418, 4
          %s2432 = int_to_ptr.vmem [resolvable:$true] %s2431
          %2434 = dma.vmem_to_hbm [thread:$0]  %s2432, 192, %s2429, %s2415
        $region56: #{tpu_custom_call.1} parent=43 // pred_fallthru
          _
      $region44: #{tpu_custom_call.1} parent=5 // pred_fallthru
        _
      %p2435 = scmp.le.s32.totalorder 2, %s21
      // Predicated region
      $region57: #{tpu_custom_call.1} parent=5 // pred_check
        %p2436 = pneg %p2435
      $region58: #{tpu_custom_call.1} parent=5 // pred_check_branch
        %2438 = sbr.rel (%p2436) target = $region60
      $region59: #{tpu_custom_call.1} parent=5 // pred_region
        %s2439 = ssub.s32 %s21, 2
        // Predicated region
        $region61: #{tpu_custom_call.1} parent=59 // pred_check
          %p2440 = pneg %p202
        $region62: #{tpu_custom_call.1} parent=59 // pred_check_branch
          %2442 = sbr.rel (%p2440) target = $region64
        $region63: #{tpu_custom_call.1} parent=59 // pred_region
          %s2443 = sand.u32 %s187, 1
          %s2444 = scalar_lea.sflag [#allocation5], %s2443
          %s2445 = sand.u32 %s187, 1
          %s2446 = smul.addr %s2445, 12
          %s2447 = scalar_lea.vmem [#allocation8], %s2446
          %2448 = dma.done %s2444, 192
        $region64: #{tpu_custom_call.1} parent=59 // pred_fallthru
          _
      $region60: #{tpu_custom_call.1} parent=5 // pred_fallthru
        _
    $region6: #{tpu_custom_call.1} parent=1 // loop_footer
      %s25 = sadd.s32 1, %s21
    $region7: #{tpu_custom_call.1} parent=1 // loop_footer_branch
      %20 = sbr.rel target = $region3
    $region8: #{tpu_custom_call.1} parent=1 // loop_exit
      _
    %2449 = vsyncpa [#allocation4], 1
    %s2450 = scalar_lea.sflag [#allocation4], 1
    %2451 = vsyncpa %s2450, 1
    %2452 = vsyncpa [#allocation7], 1
    %s2453 = scalar_lea.sflag [#allocation7], 1
    %2454 = vsyncpa %s2453, 1
    %2455 = vsyncpa [#allocation5], 1
    %s2456 = scalar_lea.sflag [#allocation5], 1
    %2457 = vsyncpa %s2456, 1

</llo_original>
